<compile_context>
chip_gen: v7x
topology: tpu7x:2x2x1
jax: 0.10.0
libtpu: 0.0.40
codegen_flags: <defaults>
</compile_context>

<pallas_src>
import jax
import jax.numpy as jnp
from jax import lax
from jax.experimental import pallas as pl
from jax.experimental.pallas import tpu as pltpu


def bottleneck_kernel(x_ref, w1_ref, b1_ref, w2_ref, b2_ref, w3_ref, b3_ref,
                      out_ref, col_ref):
    """One image per grid step.

    x_ref   : (1, H, W, Cin_p)   f32 input tile (NHWC, channel-padded)
    w1_ref  : (Cin_p, Cmid_p)    bf16, BN1 scale folded in
    w2_ref  : (9*Cmid_p, Cmid_p) bf16, 3x3 taps stacked along K, BN2 folded in
    w3_ref  : (Cmid_p, Cout_p)   bf16, BN3 scale folded in
    b*_ref  : (1, C)             f32 folded BN biases
    out_ref : (1, H, W, Cout_p)  f32
    col_ref : (H*W, 9*Cmid_p)    bf16 VMEM scratch (im2col matrix)
    """
    H, W = x_ref.shape[1], x_ref.shape[2]
    Cin = x_ref.shape[3]
    Cmid = w1_ref.shape[1]
    Cout = w3_ref.shape[1]

    # Residual path is kept in f32 (exact); only matmul operands are bf16.
    x = x_ref[0].reshape(H * W, Cin)                          # (H*W, Cin_p) f32

    # --- conv1 (1x1) [BN scale folded into w1] + bias + ReLU ----------------
    y1 = jnp.dot(x.astype(jnp.bfloat16), w1_ref[...],
                 preferred_element_type=jnp.float32)
    y1 = jnp.maximum(y1 + b1_ref[...], 0.0)                   # (H*W, Cmid_p) f32

    # --- conv2 (3x3, pad=1, stride=1) as ONE big-K im2col matmul ------------
    # col[h*W + w, (dy*3+dx)*Cmid + c] = y1[h+dy-1, w+dx-1, c]  (0 if OOB)
    # Every col_ref store is an aligned (W, Cmid_p) block; rows come from
    # statically indexed slices of the in-register y1 (no padded image scratch,
    # no per-step zero fill).
    y1_3d = y1.reshape(H, W, Cmid)
    zcol = jnp.zeros((H, 1, Cmid), jnp.float32)
    y1_wpad = jnp.concatenate([zcol, y1_3d, zcol], axis=1)    # (H, W+2, Cmid_p)
    zrow = jnp.zeros((W + 2, Cmid), jnp.float32)
    for h in range(H):
        for dy in range(3):
            r = h + dy - 1
            row = y1_wpad[r] if 0 <= r < H else zrow          # (W+2, Cmid_p) f32
            for dx in range(3):
                k = dy * 3 + dx
                col_ref[h * W:(h + 1) * W, k * Cmid:(k + 1) * Cmid] = (
                    row[dx:dx + W, :].astype(jnp.bfloat16))

    y2 = jnp.dot(col_ref[...], w2_ref[...],
                 preferred_element_type=jnp.float32)          # M=H*W, K=9*Cmid_p
    y2 = jnp.maximum(y2 + b2_ref[...], 0.0)                   # (H*W, Cmid_p) f32

    # --- conv3 (1x1, expansion=4) + bias -------------------------------------
    y3 = jnp.dot(y2.astype(jnp.bfloat16), w3_ref[...],
                 preferred_element_type=jnp.float32)
    y3 = y3 + b3_ref[...]                                     # (H*W, Cout_p) f32

    # --- residual add + final ReLU (identity path: Cin_p == Cout_p) ----------
    out = jnp.maximum(y3 + x, 0.0)
    out_ref[0] = out.reshape(H, W, Cout)


def _round_up(n, m):
    return (n + m - 1) // m * m


def _fold_bn(gamma, beta, mean, var, eps=1e-5):
    scale = gamma / jnp.sqrt(var + eps)
    bias = beta - mean * scale
    return scale, bias


def _pad_axis(a, axis, target):
    amount = target - a.shape[axis]
    if amount == 0:
        return a
    widths = [(0, 0)] * a.ndim
    widths[axis] = (0, amount)
    return jnp.pad(a, widths)


def bottleneck_pallas(x_nchw, params):
    """Run the Bottleneck forward.  x_nchw: (N, Cin, H, W) float32 (NCHW)."""
    N, Cin, H, W = x_nchw.shape
    Cmid = params["w1"].shape[0]
    Cout = params["w3"].shape[0]
    # Identity shortcut (downsample=None) requires matching channel counts.
    assert Cin == Cout, "identity shortcut needs inplanes == outplanes*expansion"

    Cin_p = _round_up(Cin, 128)
    Cmid_p = _round_up(Cmid, 128)
    Cout_p = _round_up(Cout, 128)

    # NHWC, channels zero-padded to a lane-dense multiple of 128.
    x = jnp.transpose(x_nchw, (0, 2, 3, 1)).astype(jnp.float32)
    x = _pad_axis(x, 3, Cin_p)

    # Fold BN scales into the conv weights in f32, THEN cast to bf16.
    s1, b1 = _fold_bn(params["g1"], params["be1"], params["m1"], params["v1"])
    s2, b2 = _fold_bn(params["g2"], params["be2"], params["m2"], params["v2"])
    s3, b3 = _fold_bn(params["g3"], params["be3"], params["m3"], params["v3"])

    w1 = (params["w1"][:, :, 0, 0] * s1[:, None]).T                  # (Cin, Cmid)
    w1 = _pad_axis(_pad_axis(w1, 0, Cin_p), 1, Cmid_p).astype(jnp.bfloat16)

    w2 = params["w2"] * s2[:, None, None, None]                      # OIHW, scale on O
    w2 = jnp.transpose(w2, (2, 3, 1, 0))                             # (3, 3, I, O)
    w2 = _pad_axis(_pad_axis(w2, 2, Cmid_p), 3, Cmid_p)
    w2 = w2.reshape(9 * Cmid_p, Cmid_p).astype(jnp.bfloat16)         # taps stacked on K

    w3 = (params["w3"][:, :, 0, 0] * s3[:, None]).T                  # (Cmid, Cout)
    w3 = _pad_axis(_pad_axis(w3, 0, Cmid_p), 1, Cout_p).astype(jnp.bfloat16)

    b1 = _pad_axis(b1.reshape(1, Cmid), 1, Cmid_p).astype(jnp.float32)
    b2 = _pad_axis(b2.reshape(1, Cmid), 1, Cmid_p).astype(jnp.float32)
    b3 = _pad_axis(b3.reshape(1, Cout), 1, Cout_p).astype(jnp.float32)

    def whole(shape):
        # Grid-invariant block: constant index_map, DMA'd once.
        return pl.BlockSpec(shape, lambda n: (0,) * len(shape))

    out_nhwc = pl.pallas_call(
        bottleneck_kernel,
        out_shape=jax.ShapeDtypeStruct((N, H, W, Cout_p), jnp.float32),
        grid=(N,),
        in_specs=[
            pl.BlockSpec((1, H, W, Cin_p), lambda n: (n, 0, 0, 0)),
            whole((Cin_p, Cmid_p)), whole((1, Cmid_p)),
            whole((9 * Cmid_p, Cmid_p)), whole((1, Cmid_p)),
            whole((Cmid_p, Cout_p)), whole((1, Cout_p)),
        ],
        out_specs=pl.BlockSpec((1, H, W, Cout_p), lambda n: (n, 0, 0, 0)),
        scratch_shapes=[pltpu.VMEM((H * W, 9 * Cmid_p), jnp.bfloat16)],
        compiler_params=pltpu.CompilerParams(
            dimension_semantics=("parallel",),
            vmem_limit_bytes=48 * 1024 * 1024),
    )(x, w1, b1, w2, b2, w3, b3)

    # Strip channel padding, back to NCHW.
    return jnp.transpose(out_nhwc[..., :Cout], (0, 3, 1, 2))


# ------------------------- pure-JAX reference --------------------------------
def bottleneck_ref(x, params):
    """NCHW f32 reference using lax.conv, eval-mode BatchNorm."""
    def conv(x, w, pad):
        return lax.conv_general_dilated(
            x, w, window_strides=(1, 1), padding=pad,
            dimension_numbers=("NCHW", "OIHW", "NCHW"))

    def bn(x, g, be, m, v, eps=1e-5):
        g, be, m, v = (t.reshape(1, -1, 1, 1) for t in (g, be, m, v))
        return (x - m) / jnp.sqrt(v + eps) * g + be

    out = conv(x, params["w1"], [(0, 0), (0, 0)])
    out = jax.nn.relu(bn(out, params["g1"], params["be1"], params["m1"], params["v1"]))
    out = conv(out, params["w2"], [(1, 1), (1, 1)])
    out = jax.nn.relu(bn(out, params["g2"], params["be2"], params["m2"], params["v2"]))
    out = conv(out, params["w3"], [(0, 0), (0, 0)])
    out = bn(out, params["g3"], params["be3"], params["m3"], params["v3"])
    return jax.nn.relu(out + x)


if __name__ == "__main__":
    # Small shapes: inplanes = outplanes * expansion so the identity shortcut
    # is valid (downsample=None), stride=1.
    N, H, W = 2, 8, 8
    outplanes = 8
    expansion = 4
    inplanes = outplanes * expansion          # 32
    Cout = outplanes * expansion              # 32

    key = jax.random.PRNGKey(0)
    ks = jax.random.split(key, 16)
    x = jax.random.normal(ks[0], (N, inplanes, H, W), jnp.float32)

    params = {
        # conv weights, PyTorch OIHW layout, bias=False
        "w1": 0.1 * jax.random.normal(ks[1], (outplanes, inplanes, 1, 1), jnp.float32),
        "w2": 0.1 * jax.random.normal(ks[2], (outplanes, outplanes, 3, 3), jnp.float32),
        "w3": 0.1 * jax.random.normal(ks[3], (Cout, outplanes, 1, 1), jnp.float32),
        # BatchNorm (eval-mode) parameters / running stats
        "g1": 1.0 + 0.1 * jax.random.normal(ks[4], (outplanes,), jnp.float32),
        "be1": 0.1 * jax.random.normal(ks[5], (outplanes,), jnp.float32),
        "m1": 0.1 * jax.random.normal(ks[6], (outplanes,), jnp.float32),
        "v1": 1.0 + 0.1 * jax.random.uniform(ks[7], (outplanes,), jnp.float32),
        "g2": 1.0 + 0.1 * jax.random.normal(ks[8], (outplanes,), jnp.float32),
        "be2": 0.1 * jax.random.normal(ks[9], (outplanes,), jnp.float32),
        "m2": 0.1 * jax.random.normal(ks[10], (outplanes,), jnp.float32),
        "v2": 1.0 + 0.1 * jax.random.uniform(ks[11], (outplanes,), jnp.float32),
        "g3": 1.0 + 0.1 * jax.random.normal(ks[12], (Cout,), jnp.float32),
        "be3": 0.1 * jax.random.normal(ks[13], (Cout,), jnp.float32),
        "m3": 0.1 * jax.random.normal(ks[14], (Cout,), jnp.float32),
        "v3": 1.0 + 0.1 * jax.random.uniform(ks[15], (Cout,), jnp.float32),
    }

    out = jax.block_until_ready(bottleneck_pallas(x, params))
    ref = jax.block_until_ready(bottleneck_ref(x, params))

    assert out.shape == (N, Cout, H, W), out.shape
    max_err = float(jnp.max(jnp.abs(out - ref)))
    # bf16 matmul operands introduce a few 1e-3 of rounding noise vs the f32 ref.
    assert jnp.allclose(out, ref, atol=3e-2, rtol=3e-2), max_err

    print("KERNEL_OK")
</pallas_src>

<mosaic_0001>
module attributes {stable_mosaic.version = 11 : i64} {
  func.func @bottleneck_kernel(%arg0: i32, %arg1: memref<1x8x8x128xf32, #tpu.memory_space<vmem>>, %arg2: memref<128x128xbf16, #tpu.memory_space<vmem>>, %arg3: memref<1x128xf32, #tpu.memory_space<vmem>>, %arg4: memref<1152x128xbf16, #tpu.memory_space<vmem>>, %arg5: memref<1x128xf32, #tpu.memory_space<vmem>>, %arg6: memref<128x128xbf16, #tpu.memory_space<vmem>>, %arg7: memref<1x128xf32, #tpu.memory_space<vmem>>, %arg8: memref<1x8x8x128xf32, #tpu.memory_space<vmem>>, %arg9: memref<64x1152xbf16, #tpu.memory_space<vmem>>) attributes {dimension_semantics = [#tpu.dimension_semantics<parallel>], iteration_bounds = array<i64: 2>, scalar_prefetch = 0 : i64, scratch_operands = 1 : i64, tpu.core_type = #tpu.core_type<tc>, window_params = [{transform_indices = @transform_0, window_bounds = array<i64: 1, 8, 8, 128>}, {pipeline_mode = #tpu.pipeline_mode<synchronous>, transform_indices = @transform_1, window_bounds = array<i64: 128, 128>}, {pipeline_mode = #tpu.pipeline_mode<synchronous>, transform_indices = @transform_2, window_bounds = array<i64: 1, 128>}, {pipeline_mode = #tpu.pipeline_mode<synchronous>, transform_indices = @transform_3, window_bounds = array<i64: 1152, 128>}, {pipeline_mode = #tpu.pipeline_mode<synchronous>, transform_indices = @transform_4, window_bounds = array<i64: 1, 128>}, {pipeline_mode = #tpu.pipeline_mode<synchronous>, transform_indices = @transform_5, window_bounds = array<i64: 128, 128>}, {pipeline_mode = #tpu.pipeline_mode<synchronous>, transform_indices = @transform_6, window_bounds = array<i64: 1, 128>}, {transform_indices = @transform_7, window_bounds = array<i64: 1, 8, 8, 128>}]} {
    %c0 = arith.constant 0 : index
    %c0_0 = arith.constant 0 : index
    %c0_1 = arith.constant 0 : index
    %c0_2 = arith.constant 0 : index
    %0 = vector.load %arg1[%c0, %c0_0, %c0_1, %c0_2] : memref<1x8x8x128xf32, #tpu.memory_space<vmem>>, vector<1x8x8x128xf32>
    %1 = vector.shape_cast %0 : vector<1x8x8x128xf32> to vector<8x8x128xf32>
    %2 = vector.shape_cast %1 : vector<8x8x128xf32> to vector<64x128xf32>
    %3 = arith.truncf %2 : vector<64x128xf32> to vector<64x128xbf16>
    %c0_3 = arith.constant 0 : index
    %c0_4 = arith.constant 0 : index
    %4 = vector.load %arg2[%c0_3, %c0_4] : memref<128x128xbf16, #tpu.memory_space<vmem>>, vector<128x128xbf16>
    %cst = arith.constant dense<0.000000e+00> : vector<64x128xf32>
    %5 = tpu.matmul %3, %4, %cst {dimension_numbers = #tpu.dot_dimension_numbers<[1], [0], [0], [1], [0, 0, 1, 1], [], []>} : vector<64x128xbf16>, vector<128x128xbf16>, vector<64x128xf32> -> vector<64x128xf32>
    %c0_5 = arith.constant 0 : index
    %c0_6 = arith.constant 0 : index
    %6 = vector.load %arg3[%c0_5, %c0_6] : memref<1x128xf32, #tpu.memory_space<vmem>>, vector<1x128xf32>
    %7 = vector.broadcast %6 : vector<1x128xf32> to vector<64x128xf32>
    %8 = arith.addf %5, %7 : vector<64x128xf32>
    %cst_7 = arith.constant 0.000000e+00 : f32
    %9 = vector.broadcast %cst_7 : f32 to vector<64x128xf32>
    %10 = arith.maximumf %8, %9 : vector<64x128xf32>
    %11 = vector.shape_cast %10 : vector<64x128xf32> to vector<8x8x128xf32>
    %cst_8 = arith.constant 0.000000e+00 : f32
    %12 = vector.broadcast %cst_8 : f32 to vector<8x1x128xf32>
    %13 = tpu.concatenate %12, %11, %12 in 1 : vector<8x1x128xf32>, vector<8x8x128xf32>, vector<8x1x128xf32> -> vector<8x10x128xf32>
    %cst_9 = arith.constant 0.000000e+00 : f32
    %14 = vector.broadcast %cst_9 : f32 to vector<10x128xf32>
    %15 = vector.extract_strided_slice %14 {offsets = [0, 0], sizes = [8, 128], strides = [1, 1]} : vector<10x128xf32> to vector<8x128xf32>
    %16 = arith.truncf %15 : vector<8x128xf32> to vector<8x128xbf16>
    %c0_10 = arith.constant 0 : index
    %c0_11 = arith.constant 0 : index
    %17 = vector.load %arg9[%c0_10, %c0_11] : memref<64x1152xbf16, #tpu.memory_space<vmem>>, vector<8x128xbf16>
    tpu.vector_store %arg9[%c0_10, %c0_11], %16 {strides = array<i32>} : memref<64x1152xbf16, #tpu.memory_space<vmem>>, vector<8x128xbf16>,
    %18 = vector.extract_strided_slice %14 {offsets = [1, 0], sizes = [8, 128], strides = [1, 1]} : vector<10x128xf32> to vector<8x128xf32>
    %19 = arith.truncf %18 : vector<8x128xf32> to vector<8x128xbf16>
    %c0_12 = arith.constant 0 : index
    %c128 = arith.constant 128 : index
    %20 = vector.load %arg9[%c0_12, %c128] : memref<64x1152xbf16, #tpu.memory_space<vmem>>, vector<8x128xbf16>
    tpu.vector_store %arg9[%c0_12, %c128], %19 {strides = array<i32>} : memref<64x1152xbf16, #tpu.memory_space<vmem>>, vector<8x128xbf16>,
    %21 = vector.extract_strided_slice %14 {offsets = [2, 0], sizes = [8, 128], strides = [1, 1]} : vector<10x128xf32> to vector<8x128xf32>
    %22 = arith.truncf %21 : vector<8x128xf32> to vector<8x128xbf16>
    %c0_13 = arith.constant 0 : index
    %c256 = arith.constant 256 : index
    %23 = vector.load %arg9[%c0_13, %c256] : memref<64x1152xbf16, #tpu.memory_space<vmem>>, vector<8x128xbf16>
    tpu.vector_store %arg9[%c0_13, %c256], %22 {strides = array<i32>} : memref<64x1152xbf16, #tpu.memory_space<vmem>>, vector<8x128xbf16>,
    %24 = vector.extract_strided_slice %13 {offsets = [0, 0, 0], sizes = [1, 10, 128], strides = [1, 1, 1]} : vector<8x10x128xf32> to vector<1x10x128xf32>
    %25 = vector.shape_cast %24 : vector<1x10x128xf32> to vector<10x128xf32>
    %26 = vector.extract_strided_slice %25 {offsets = [0, 0], sizes = [8, 128], strides = [1, 1]} : vector<10x128xf32> to vector<8x128xf32>
    %27 = arith.truncf %26 : vector<8x128xf32> to vector<8x128xbf16>
    %c0_14 = arith.constant 0 : index
    %c384 = arith.constant 384 : index
    %28 = vector.load %arg9[%c0_14, %c384] : memref<64x1152xbf16, #tpu.memory_space<vmem>>, vector<8x128xbf16>
    tpu.vector_store %arg9[%c0_14, %c384], %27 {strides = array<i32>} : memref<64x1152xbf16, #tpu.memory_space<vmem>>, vector<8x128xbf16>,
    %29 = vector.extract_strided_slice %25 {offsets = [1, 0], sizes = [8, 128], strides = [1, 1]} : vector<10x128xf32> to vector<8x128xf32>
    %30 = arith.truncf %29 : vector<8x128xf32> to vector<8x128xbf16>
    %c0_15 = arith.constant 0 : index
    %c512 = arith.constant 512 : index
    %31 = vector.load %arg9[%c0_15, %c512] : memref<64x1152xbf16, #tpu.memory_space<vmem>>, vector<8x128xbf16>
    tpu.vector_store %arg9[%c0_15, %c512], %30 {strides = array<i32>} : memref<64x1152xbf16, #tpu.memory_space<vmem>>, vector<8x128xbf16>,
    %32 = vector.extract_strided_slice %25 {offsets = [2, 0], sizes = [8, 128], strides = [1, 1]} : vector<10x128xf32> to vector<8x128xf32>
    %33 = arith.truncf %32 : vector<8x128xf32> to vector<8x128xbf16>
    %c0_16 = arith.constant 0 : index
    %c640 = arith.constant 640 : index
    %34 = vector.load %arg9[%c0_16, %c640] : memref<64x1152xbf16, #tpu.memory_space<vmem>>, vector<8x128xbf16>
    tpu.vector_store %arg9[%c0_16, %c640], %33 {strides = array<i32>} : memref<64x1152xbf16, #tpu.memory_space<vmem>>, vector<8x128xbf16>,
    %35 = vector.extract_strided_slice %13 {offsets = [1, 0, 0], sizes = [1, 10, 128], strides = [1, 1, 1]} : vector<8x10x128xf32> to vector<1x10x128xf32>
    %36 = vector.shape_cast %35 : vector<1x10x128xf32> to vector<10x128xf32>
    %37 = vector.extract_strided_slice %36 {offsets = [0, 0], sizes = [8, 128], strides = [1, 1]} : vector<10x128xf32> to vector<8x128xf32>
    %38 = arith.truncf %37 : vector<8x128xf32> to vector<8x128xbf16>
    %c0_17 = arith.constant 0 : index
    %c768 = arith.constant 768 : index
    %39 = vector.load %arg9[%c0_17, %c768] : memref<64x1152xbf16, #tpu.memory_space<vmem>>, vector<8x128xbf16>
    tpu.vector_store %arg9[%c0_17, %c768], %38 {strides = array<i32>} : memref<64x1152xbf16, #tpu.memory_space<vmem>>, vector<8x128xbf16>,
    %40 = vector.extract_strided_slice %36 {offsets = [1, 0], sizes = [8, 128], strides = [1, 1]} : vector<10x128xf32> to vector<8x128xf32>
    %41 = arith.truncf %40 : vector<8x128xf32> to vector<8x128xbf16>
    %c0_18 = arith.constant 0 : index
    %c896 = arith.constant 896 : index
    %42 = vector.load %arg9[%c0_18, %c896] : memref<64x1152xbf16, #tpu.memory_space<vmem>>, vector<8x128xbf16>
    tpu.vector_store %arg9[%c0_18, %c896], %41 {strides = array<i32>} : memref<64x1152xbf16, #tpu.memory_space<vmem>>, vector<8x128xbf16>,
    %43 = vector.extract_strided_slice %36 {offsets = [2, 0], sizes = [8, 128], strides = [1, 1]} : vector<10x128xf32> to vector<8x128xf32>
    %44 = arith.truncf %43 : vector<8x128xf32> to vector<8x128xbf16>
    %c0_19 = arith.constant 0 : index
    %c1024 = arith.constant 1024 : index
    %45 = vector.load %arg9[%c0_19, %c1024] : memref<64x1152xbf16, #tpu.memory_space<vmem>>, vector<8x128xbf16>
    tpu.vector_store %arg9[%c0_19, %c1024], %44 {strides = array<i32>} : memref<64x1152xbf16, #tpu.memory_space<vmem>>, vector<8x128xbf16>,
    %46 = vector.extract_strided_slice %13 {offsets = [0, 0, 0], sizes = [1, 10, 128], strides = [1, 1, 1]} : vector<8x10x128xf32> to vector<1x10x128xf32>
    %47 = vector.shape_cast %46 : vector<1x10x128xf32> to vector<10x128xf32>
    %48 = vector.extract_strided_slice %47 {offsets = [0, 0], sizes = [8, 128], strides = [1, 1]} : vector<10x128xf32> to vector<8x128xf32>
    %49 = arith.truncf %48 : vector<8x128xf32> to vector<8x128xbf16>
    %c8 = arith.constant 8 : index
    %c0_20 = arith.constant 0 : index
    %50 = vector.load %arg9[%c8, %c0_20] : memref<64x1152xbf16, #tpu.memory_space<vmem>>, vector<8x128xbf16>
    tpu.vector_store %arg9[%c8, %c0_20], %49 {strides = array<i32>} : memref<64x1152xbf16, #tpu.memory_space<vmem>>, vector<8x128xbf16>,
    %51 = vector.extract_strided_slice %47 {offsets = [1, 0], sizes = [8, 128], strides = [1, 1]} : vector<10x128xf32> to vector<8x128xf32>
    %52 = arith.truncf %51 : vector<8x128xf32> to vector<8x128xbf16>
    %c8_21 = arith.constant 8 : index
    %c128_22 = arith.constant 128 : index
    %53 = vector.load %arg9[%c8_21, %c128_22] : memref<64x1152xbf16, #tpu.memory_space<vmem>>, vector<8x128xbf16>
    tpu.vector_store %arg9[%c8_21, %c128_22], %52 {strides = array<i32>} : memref<64x1152xbf16, #tpu.memory_space<vmem>>, vector<8x128xbf16>,
    %54 = vector.extract_strided_slice %47 {offsets = [2, 0], sizes = [8, 128], strides = [1, 1]} : vector<10x128xf32> to vector<8x128xf32>
    %55 = arith.truncf %54 : vector<8x128xf32> to vector<8x128xbf16>
    %c8_23 = arith.constant 8 : index
    %c256_24 = arith.constant 256 : index
    %56 = vector.load %arg9[%c8_23, %c256_24] : memref<64x1152xbf16, #tpu.memory_space<vmem>>, vector<8x128xbf16>
    tpu.vector_store %arg9[%c8_23, %c256_24], %55 {strides = array<i32>} : memref<64x1152xbf16, #tpu.memory_space<vmem>>, vector<8x128xbf16>,
    %57 = vector.extract_strided_slice %13 {offsets = [1, 0, 0], sizes = [1, 10, 128], strides = [1, 1, 1]} : vector<8x10x128xf32> to vector<1x10x128xf32>
    %58 = vector.shape_cast %57 : vector<1x10x128xf32> to vector<10x128xf32>
    %59 = vector.extract_strided_slice %58 {offsets = [0, 0], sizes = [8, 128], strides = [1, 1]} : vector<10x128xf32> to vector<8x128xf32>
    %60 = arith.truncf %59 : vector<8x128xf32> to vector<8x128xbf16>
    %c8_25 = arith.constant 8 : index
    %c384_26 = arith.constant 384 : index
    %61 = vector.load %arg9[%c8_25, %c384_26] : memref<64x1152xbf16, #tpu.memory_space<vmem>>, vector<8x128xbf16>
    tpu.vector_store %arg9[%c8_25, %c384_26], %60 {strides = array<i32>} : memref<64x1152xbf16, #tpu.memory_space<vmem>>, vector<8x128xbf16>,
    %62 = vector.extract_strided_slice %58 {offsets = [1, 0], sizes = [8, 128], strides = [1, 1]} : vector<10x128xf32> to vector<8x128xf32>
    %63 = arith.truncf %62 : vector<8x128xf32> to vector<8x128xbf16>
    %c8_27 = arith.constant 8 : index
    %c512_28 = arith.constant 512 : index
    %64 = vector.load %arg9[%c8_27, %c512_28] : memref<64x1152xbf16, #tpu.memory_space<vmem>>, vector<8x128xbf16>
    tpu.vector_store %arg9[%c8_27, %c512_28], %63 {strides = array<i32>} : memref<64x1152xbf16, #tpu.memory_space<vmem>>, vector<8x128xbf16>,
    %65 = vector.extract_strided_slice %58 {offsets = [2, 0], sizes = [8, 128], strides = [1, 1]} : vector<10x128xf32> to vector<8x128xf32>
    %66 = arith.truncf %65 : vector<8x128xf32> to vector<8x128xbf16>
    %c8_29 = arith.constant 8 : index
    %c640_30 = arith.constant 640 : index
    %67 = vector.load %arg9[%c8_29, %c640_30] : memref<64x1152xbf16, #tpu.memory_space<vmem>>, vector<8x128xbf16>
    tpu.vector_store %arg9[%c8_29, %c640_30], %66 {strides = array<i32>} : memref<64x1152xbf16, #tpu.memory_space<vmem>>, vector<8x128xbf16>,
    %68 = vector.extract_strided_slice %13 {offsets = [2, 0, 0], sizes = [1, 10, 128], strides = [1, 1, 1]} : vector<8x10x128xf32> to vector<1x10x128xf32>
    %69 = vector.shape_cast %68 : vector<1x10x128xf32> to vector<10x128xf32>
    %70 = vector.extract_strided_slice %69 {offsets = [0, 0], sizes = [8, 128], strides = [1, 1]} : vector<10x128xf32> to vector<8x128xf32>
    %71 = arith.truncf %70 : vector<8x128xf32> to vector<8x128xbf16>
    %c8_31 = arith.constant 8 : index
    %c768_32 = arith.constant 768 : index
    %72 = vector.load %arg9[%c8_31, %c768_32] : memref<64x1152xbf16, #tpu.memory_space<vmem>>, vector<8x128xbf16>
    tpu.vector_store %arg9[%c8_31, %c768_32], %71 {strides = array<i32>} : memref<64x1152xbf16, #tpu.memory_space<vmem>>, vector<8x128xbf16>,
    %73 = vector.extract_strided_slice %69 {offsets = [1, 0], sizes = [8, 128], strides = [1, 1]} : vector<10x128xf32> to vector<8x128xf32>
    %74 = arith.truncf %73 : vector<8x128xf32> to vector<8x128xbf16>
    %c8_33 = arith.constant 8 : index
    %c896_34 = arith.constant 896 : index
    %75 = vector.load %arg9[%c8_33, %c896_34] : memref<64x1152xbf16, #tpu.memory_space<vmem>>, vector<8x128xbf16>
    tpu.vector_store %arg9[%c8_33, %c896_34], %74 {strides = array<i32>} : memref<64x1152xbf16, #tpu.memory_space<vmem>>, vector<8x128xbf16>,
    %76 = vector.extract_strided_slice %69 {offsets = [2, 0], sizes = [8, 128], strides = [1, 1]} : vector<10x128xf32> to vector<8x128xf32>
    %77 = arith.truncf %76 : vector<8x128xf32> to vector<8x128xbf16>
    %c8_35 = arith.constant 8 : index
    %c1024_36 = arith.constant 1024 : index
    %78 = vector.load %arg9[%c8_35, %c1024_36] : memref<64x1152xbf16, #tpu.memory_space<vmem>>, vector<8x128xbf16>
    tpu.vector_store %arg9[%c8_35, %c1024_36], %77 {strides = array<i32>} : memref<64x1152xbf16, #tpu.memory_space<vmem>>, vector<8x128xbf16>,
    %79 = vector.extract_strided_slice %13 {offsets = [1, 0, 0], sizes = [1, 10, 128], strides = [1, 1, 1]} : vector<8x10x128xf32> to vector<1x10x128xf32>
    %80 = vector.shape_cast %79 : vector<1x10x128xf32> to vector<10x128xf32>
    %81 = vector.extract_strided_slice %80 {offsets = [0, 0], sizes = [8, 128], strides = [1, 1]} : vector<10x128xf32> to vector<8x128xf32>
    %82 = arith.truncf %81 : vector<8x128xf32> to vector<8x128xbf16>
    %c16 = arith.constant 16 : index
    %c0_37 = arith.constant 0 : index
    %83 = vector.load %arg9[%c16, %c0_37] : memref<64x1152xbf16, #tpu.memory_space<vmem>>, vector<8x128xbf16>
    tpu.vector_store %arg9[%c16, %c0_37], %82 {strides = array<i32>} : memref<64x1152xbf16, #tpu.memory_space<vmem>>, vector<8x128xbf16>,
    %84 = vector.extract_strided_slice %80 {offsets = [1, 0], sizes = [8, 128], strides = [1, 1]} : vector<10x128xf32> to vector<8x128xf32>
    %85 = arith.truncf %84 : vector<8x128xf32> to vector<8x128xbf16>
    %c16_38 = arith.constant 16 : index
    %c128_39 = arith.constant 128 : index
    %86 = vector.load %arg9[%c16_38, %c128_39] : memref<64x1152xbf16, #tpu.memory_space<vmem>>, vector<8x128xbf16>
    tpu.vector_store %arg9[%c16_38, %c128_39], %85 {strides = array<i32>} : memref<64x1152xbf16, #tpu.memory_space<vmem>>, vector<8x128xbf16>,
    %87 = vector.extract_strided_slice %80 {offsets = [2, 0], sizes = [8, 128], strides = [1, 1]} : vector<10x128xf32> to vector<8x128xf32>
    %88 = arith.truncf %87 : vector<8x128xf32> to vector<8x128xbf16>
    %c16_40 = arith.constant 16 : index
    %c256_41 = arith.constant 256 : index
    %89 = vector.load %arg9[%c16_40, %c256_41] : memref<64x1152xbf16, #tpu.memory_space<vmem>>, vector<8x128xbf16>
    tpu.vector_store %arg9[%c16_40, %c256_41], %88 {strides = array<i32>} : memref<64x1152xbf16, #tpu.memory_space<vmem>>, vector<8x128xbf16>,
    %90 = vector.extract_strided_slice %13 {offsets = [2, 0, 0], sizes = [1, 10, 128], strides = [1, 1, 1]} : vector<8x10x128xf32> to vector<1x10x128xf32>
    %91 = vector.shape_cast %90 : vector<1x10x128xf32> to vector<10x128xf32>
    %92 = vector.extract_strided_slice %91 {offsets = [0, 0], sizes = [8, 128], strides = [1, 1]} : vector<10x128xf32> to vector<8x128xf32>
    %93 = arith.truncf %92 : vector<8x128xf32> to vector<8x128xbf16>
    %c16_42 = arith.constant 16 : index
    %c384_43 = arith.constant 384 : index
    %94 = vector.load %arg9[%c16_42, %c384_43] : memref<64x1152xbf16, #tpu.memory_space<vmem>>, vector<8x128xbf16>
    tpu.vector_store %arg9[%c16_42, %c384_43], %93 {strides = array<i32>} : memref<64x1152xbf16, #tpu.memory_space<vmem>>, vector<8x128xbf16>,
    %95 = vector.extract_strided_slice %91 {offsets = [1, 0], sizes = [8, 128], strides = [1, 1]} : vector<10x128xf32> to vector<8x128xf32>
    %96 = arith.truncf %95 : vector<8x128xf32> to vector<8x128xbf16>
    %c16_44 = arith.constant 16 : index
    %c512_45 = arith.constant 512 : index
    %97 = vector.load %arg9[%c16_44, %c512_45] : memref<64x1152xbf16, #tpu.memory_space<vmem>>, vector<8x128xbf16>
    tpu.vector_store %arg9[%c16_44, %c512_45], %96 {strides = array<i32>} : memref<64x1152xbf16, #tpu.memory_space<vmem>>, vector<8x128xbf16>,
    %98 = vector.extract_strided_slice %91 {offsets = [2, 0], sizes = [8, 128], strides = [1, 1]} : vector<10x128xf32> to vector<8x128xf32>
    %99 = arith.truncf %98 : vector<8x128xf32> to vector<8x128xbf16>
    %c16_46 = arith.constant 16 : index
    %c640_47 = arith.constant 640 : index
    %100 = vector.load %arg9[%c16_46, %c640_47] : memref<64x1152xbf16, #tpu.memory_space<vmem>>, vector<8x128xbf16>
    tpu.vector_store %arg9[%c16_46, %c640_47], %99 {strides = array<i32>} : memref<64x1152xbf16, #tpu.memory_space<vmem>>, vector<8x128xbf16>,
    %101 = vector.extract_strided_slice %13 {offsets = [3, 0, 0], sizes = [1, 10, 128], strides = [1, 1, 1]} : vector<8x10x128xf32> to vector<1x10x128xf32>
    %102 = vector.shape_cast %101 : vector<1x10x128xf32> to vector<10x128xf32>
    %103 = vector.extract_strided_slice %102 {offsets = [0, 0], sizes = [8, 128], strides = [1, 1]} : vector<10x128xf32> to vector<8x128xf32>
    %104 = arith.truncf %103 : vector<8x128xf32> to vector<8x128xbf16>
    %c16_48 = arith.constant 16 : index
    %c768_49 = arith.constant 768 : index
    %105 = vector.load %arg9[%c16_48, %c768_49] : memref<64x1152xbf16, #tpu.memory_space<vmem>>, vector<8x128xbf16>
    tpu.vector_store %arg9[%c16_48, %c768_49], %104 {strides = array<i32>} : memref<64x1152xbf16, #tpu.memory_space<vmem>>, vector<8x128xbf16>,
    %106 = vector.extract_strided_slice %102 {offsets = [1, 0], sizes = [8, 128], strides = [1, 1]} : vector<10x128xf32> to vector<8x128xf32>
    %107 = arith.truncf %106 : vector<8x128xf32> to vector<8x128xbf16>
    %c16_50 = arith.constant 16 : index
    %c896_51 = arith.constant 896 : index
    %108 = vector.load %arg9[%c16_50, %c896_51] : memref<64x1152xbf16, #tpu.memory_space<vmem>>, vector<8x128xbf16>
    tpu.vector_store %arg9[%c16_50, %c896_51], %107 {strides = array<i32>} : memref<64x1152xbf16, #tpu.memory_space<vmem>>, vector<8x128xbf16>,
    %109 = vector.extract_strided_slice %102 {offsets = [2, 0], sizes = [8, 128], strides = [1, 1]} : vector<10x128xf32> to vector<8x128xf32>
    %110 = arith.truncf %109 : vector<8x128xf32> to vector<8x128xbf16>
    %c16_52 = arith.constant 16 : index
    %c1024_53 = arith.constant 1024 : index
    %111 = vector.load %arg9[%c16_52, %c1024_53] : memref<64x1152xbf16, #tpu.memory_space<vmem>>, vector<8x128xbf16>
    tpu.vector_store %arg9[%c16_52, %c1024_53], %110 {strides = array<i32>} : memref<64x1152xbf16, #tpu.memory_space<vmem>>, vector<8x128xbf16>,
    %112 = vector.extract_strided_slice %13 {offsets = [2, 0, 0], sizes = [1, 10, 128], strides = [1, 1, 1]} : vector<8x10x128xf32> to vector<1x10x128xf32>
    %113 = vector.shape_cast %112 : vector<1x10x128xf32> to vector<10x128xf32>
    %114 = vector.extract_strided_slice %113 {offsets = [0, 0], sizes = [8, 128], strides = [1, 1]} : vector<10x128xf32> to vector<8x128xf32>
    %115 = arith.truncf %114 : vector<8x128xf32> to vector<8x128xbf16>
    %c24 = arith.constant 24 : index
    %c0_54 = arith.constant 0 : index
    %116 = vector.load %arg9[%c24, %c0_54] : memref<64x1152xbf16, #tpu.memory_space<vmem>>, vector<8x128xbf16>
    tpu.vector_store %arg9[%c24, %c0_54], %115 {strides = array<i32>} : memref<64x1152xbf16, #tpu.memory_space<vmem>>, vector<8x128xbf16>,
    %117 = vector.extract_strided_slice %113 {offsets = [1, 0], sizes = [8, 128], strides = [1, 1]} : vector<10x128xf32> to vector<8x128xf32>
    %118 = arith.truncf %117 : vector<8x128xf32> to vector<8x128xbf16>
    %c24_55 = arith.constant 24 : index
    %c128_56 = arith.constant 128 : index
    %119 = vector.load %arg9[%c24_55, %c128_56] : memref<64x1152xbf16, #tpu.memory_space<vmem>>, vector<8x128xbf16>
    tpu.vector_store %arg9[%c24_55, %c128_56], %118 {strides = array<i32>} : memref<64x1152xbf16, #tpu.memory_space<vmem>>, vector<8x128xbf16>,
    %120 = vector.extract_strided_slice %113 {offsets = [2, 0], sizes = [8, 128], strides = [1, 1]} : vector<10x128xf32> to vector<8x128xf32>
    %121 = arith.truncf %120 : vector<8x128xf32> to vector<8x128xbf16>
    %c24_57 = arith.constant 24 : index
    %c256_58 = arith.constant 256 : index
    %122 = vector.load %arg9[%c24_57, %c256_58] : memref<64x1152xbf16, #tpu.memory_space<vmem>>, vector<8x128xbf16>
    tpu.vector_store %arg9[%c24_57, %c256_58], %121 {strides = array<i32>} : memref<64x1152xbf16, #tpu.memory_space<vmem>>, vector<8x128xbf16>,
    %123 = vector.extract_strided_slice %13 {offsets = [3, 0, 0], sizes = [1, 10, 128], strides = [1, 1, 1]} : vector<8x10x128xf32> to vector<1x10x128xf32>
    %124 = vector.shape_cast %123 : vector<1x10x128xf32> to vector<10x128xf32>
    %125 = vector.extract_strided_slice %124 {offsets = [0, 0], sizes = [8, 128], strides = [1, 1]} : vector<10x128xf32> to vector<8x128xf32>
    %126 = arith.truncf %125 : vector<8x128xf32> to vector<8x128xbf16>
    %c24_59 = arith.constant 24 : index
    %c384_60 = arith.constant 384 : index
    %127 = vector.load %arg9[%c24_59, %c384_60] : memref<64x1152xbf16, #tpu.memory_space<vmem>>, vector<8x128xbf16>
    tpu.vector_store %arg9[%c24_59, %c384_60], %126 {strides = array<i32>} : memref<64x1152xbf16, #tpu.memory_space<vmem>>, vector<8x128xbf16>,
    %128 = vector.extract_strided_slice %124 {offsets = [1, 0], sizes = [8, 128], strides = [1, 1]} : vector<10x128xf32> to vector<8x128xf32>
    %129 = arith.truncf %128 : vector<8x128xf32> to vector<8x128xbf16>
    %c24_61 = arith.constant 24 : index
    %c512_62 = arith.constant 512 : index
    %130 = vector.load %arg9[%c24_61, %c512_62] : memref<64x1152xbf16, #tpu.memory_space<vmem>>, vector<8x128xbf16>
    tpu.vector_store %arg9[%c24_61, %c512_62], %129 {strides = array<i32>} : memref<64x1152xbf16, #tpu.memory_space<vmem>>, vector<8x128xbf16>,
    %131 = vector.extract_strided_slice %124 {offsets = [2, 0], sizes = [8, 128], strides = [1, 1]} : vector<10x128xf32> to vector<8x128xf32>
    %132 = arith.truncf %131 : vector<8x128xf32> to vector<8x128xbf16>
    %c24_63 = arith.constant 24 : index
    %c640_64 = arith.constant 640 : index
    %133 = vector.load %arg9[%c24_63, %c640_64] : memref<64x1152xbf16, #tpu.memory_space<vmem>>, vector<8x128xbf16>
    tpu.vector_store %arg9[%c24_63, %c640_64], %132 {strides = array<i32>} : memref<64x1152xbf16, #tpu.memory_space<vmem>>, vector<8x128xbf16>,
    %134 = vector.extract_strided_slice %13 {offsets = [4, 0, 0], sizes = [1, 10, 128], strides = [1, 1, 1]} : vector<8x10x128xf32> to vector<1x10x128xf32>
    %135 = vector.shape_cast %134 : vector<1x10x128xf32> to vector<10x128xf32>
    %136 = vector.extract_strided_slice %135 {offsets = [0, 0], sizes = [8, 128], strides = [1, 1]} : vector<10x128xf32> to vector<8x128xf32>
    %137 = arith.truncf %136 : vector<8x128xf32> to vector<8x128xbf16>
    %c24_65 = arith.constant 24 : index
    %c768_66 = arith.constant 768 : index
    %138 = vector.load %arg9[%c24_65, %c768_66] : memref<64x1152xbf16, #tpu.memory_space<vmem>>, vector<8x128xbf16>
    tpu.vector_store %arg9[%c24_65, %c768_66], %137 {strides = array<i32>} : memref<64x1152xbf16, #tpu.memory_space<vmem>>, vector<8x128xbf16>,
    %139 = vector.extract_strided_slice %135 {offsets = [1, 0], sizes = [8, 128], strides = [1, 1]} : vector<10x128xf32> to vector<8x128xf32>
    %140 = arith.truncf %139 : vector<8x128xf32> to vector<8x128xbf16>
    %c24_67 = arith.constant 24 : index
    %c896_68 = arith.constant 896 : index
    %141 = vector.load %arg9[%c24_67, %c896_68] : memref<64x1152xbf16, #tpu.memory_space<vmem>>, vector<8x128xbf16>
    tpu.vector_store %arg9[%c24_67, %c896_68], %140 {strides = array<i32>} : memref<64x1152xbf16, #tpu.memory_space<vmem>>, vector<8x128xbf16>,
    %142 = vector.extract_strided_slice %135 {offsets = [2, 0], sizes = [8, 128], strides = [1, 1]} : vector<10x128xf32> to vector<8x128xf32>
    %143 = arith.truncf %142 : vector<8x128xf32> to vector<8x128xbf16>
    %c24_69 = arith.constant 24 : index
    %c1024_70 = arith.constant 1024 : index
    %144 = vector.load %arg9[%c24_69, %c1024_70] : memref<64x1152xbf16, #tpu.memory_space<vmem>>, vector<8x128xbf16>
    tpu.vector_store %arg9[%c24_69, %c1024_70], %143 {strides = array<i32>} : memref<64x1152xbf16, #tpu.memory_space<vmem>>, vector<8x128xbf16>,
    %145 = vector.extract_strided_slice %13 {offsets = [3, 0, 0], sizes = [1, 10, 128], strides = [1, 1, 1]} : vector<8x10x128xf32> to vector<1x10x128xf32>
    %146 = vector.shape_cast %145 : vector<1x10x128xf32> to vector<10x128xf32>
    %147 = vector.extract_strided_slice %146 {offsets = [0, 0], sizes = [8, 128], strides = [1, 1]} : vector<10x128xf32> to vector<8x128xf32>
    %148 = arith.truncf %147 : vector<8x128xf32> to vector<8x128xbf16>
    %c32 = arith.constant 32 : index
    %c0_71 = arith.constant 0 : index
    %149 = vector.load %arg9[%c32, %c0_71] : memref<64x1152xbf16, #tpu.memory_space<vmem>>, vector<8x128xbf16>
    tpu.vector_store %arg9[%c32, %c0_71], %148 {strides = array<i32>} : memref<64x1152xbf16, #tpu.memory_space<vmem>>, vector<8x128xbf16>,
    %150 = vector.extract_strided_slice %146 {offsets = [1, 0], sizes = [8, 128], strides = [1, 1]} : vector<10x128xf32> to vector<8x128xf32>
    %151 = arith.truncf %150 : vector<8x128xf32> to vector<8x128xbf16>
    %c32_72 = arith.constant 32 : index
    %c128_73 = arith.constant 128 : index
    %152 = vector.load %arg9[%c32_72, %c128_73] : memref<64x1152xbf16, #tpu.memory_space<vmem>>, vector<8x128xbf16>
    tpu.vector_store %arg9[%c32_72, %c128_73], %151 {strides = array<i32>} : memref<64x1152xbf16, #tpu.memory_space<vmem>>, vector<8x128xbf16>,
    %153 = vector.extract_strided_slice %146 {offsets = [2, 0], sizes = [8, 128], strides = [1, 1]} : vector<10x128xf32> to vector<8x128xf32>
    %154 = arith.truncf %153 : vector<8x128xf32> to vector<8x128xbf16>
    %c32_74 = arith.constant 32 : index
    %c256_75 = arith.constant 256 : index
    %155 = vector.load %arg9[%c32_74, %c256_75] : memref<64x1152xbf16, #tpu.memory_space<vmem>>, vector<8x128xbf16>
    tpu.vector_store %arg9[%c32_74, %c256_75], %154 {strides = array<i32>} : memref<64x1152xbf16, #tpu.memory_space<vmem>>, vector<8x128xbf16>,
    %156 = vector.extract_strided_slice %13 {offsets = [4, 0, 0], sizes = [1, 10, 128], strides = [1, 1, 1]} : vector<8x10x128xf32> to vector<1x10x128xf32>
    %157 = vector.shape_cast %156 : vector<1x10x128xf32> to vector<10x128xf32>
    %158 = vector.extract_strided_slice %157 {offsets = [0, 0], sizes = [8, 128], strides = [1, 1]} : vector<10x128xf32> to vector<8x128xf32>
    %159 = arith.truncf %158 : vector<8x128xf32> to vector<8x128xbf16>
    %c32_76 = arith.constant 32 : index
    %c384_77 = arith.constant 384 : index
    %160 = vector.load %arg9[%c32_76, %c384_77] : memref<64x1152xbf16, #tpu.memory_space<vmem>>, vector<8x128xbf16>
    tpu.vector_store %arg9[%c32_76, %c384_77], %159 {strides = array<i32>} : memref<64x1152xbf16, #tpu.memory_space<vmem>>, vector<8x128xbf16>,
    %161 = vector.extract_strided_slice %157 {offsets = [1, 0], sizes = [8, 128], strides = [1, 1]} : vector<10x128xf32> to vector<8x128xf32>
    %162 = arith.truncf %161 : vector<8x128xf32> to vector<8x128xbf16>
    %c32_78 = arith.constant 32 : index
    %c512_79 = arith.constant 512 : index
    %163 = vector.load %arg9[%c32_78, %c512_79] : memref<64x1152xbf16, #tpu.memory_space<vmem>>, vector<8x128xbf16>
    tpu.vector_store %arg9[%c32_78, %c512_79], %162 {strides = array<i32>} : memref<64x1152xbf16, #tpu.memory_space<vmem>>, vector<8x128xbf16>,
    %164 = vector.extract_strided_slice %157 {offsets = [2, 0], sizes = [8, 128], strides = [1, 1]} : vector<10x128xf32> to vector<8x128xf32>
    %165 = arith.truncf %164 : vector<8x128xf32> to vector<8x128xbf16>
    %c32_80 = arith.constant 32 : index
    %c640_81 = arith.constant 640 : index
    %166 = vector.load %arg9[%c32_80, %c640_81] : memref<64x1152xbf16, #tpu.memory_space<vmem>>, vector<8x128xbf16>
    tpu.vector_store %arg9[%c32_80, %c640_81], %165 {strides = array<i32>} : memref<64x1152xbf16, #tpu.memory_space<vmem>>, vector<8x128xbf16>,
    %167 = vector.extract_strided_slice %13 {offsets = [5, 0, 0], sizes = [1, 10, 128], strides = [1, 1, 1]} : vector<8x10x128xf32> to vector<1x10x128xf32>
    %168 = vector.shape_cast %167 : vector<1x10x128xf32> to vector<10x128xf32>
    %169 = vector.extract_strided_slice %168 {offsets = [0, 0], sizes = [8, 128], strides = [1, 1]} : vector<10x128xf32> to vector<8x128xf32>
    %170 = arith.truncf %169 : vector<8x128xf32> to vector<8x128xbf16>
    %c32_82 = arith.constant 32 : index
    %c768_83 = arith.constant 768 : index
    %171 = vector.load %arg9[%c32_82, %c768_83] : memref<64x1152xbf16, #tpu.memory_space<vmem>>, vector<8x128xbf16>
    tpu.vector_store %arg9[%c32_82, %c768_83], %170 {strides = array<i32>} : memref<64x1152xbf16, #tpu.memory_space<vmem>>, vector<8x128xbf16>,
    %172 = vector.extract_strided_slice %168 {offsets = [1, 0], sizes = [8, 128], strides = [1, 1]} : vector<10x128xf32> to vector<8x128xf32>
    %173 = arith.truncf %172 : vector<8x128xf32> to vector<8x128xbf16>
    %c32_84 = arith.constant 32 : index
    %c896_85 = arith.constant 896 : index
    %174 = vector.load %arg9[%c32_84, %c896_85] : memref<64x1152xbf16, #tpu.memory_space<vmem>>, vector<8x128xbf16>
    tpu.vector_store %arg9[%c32_84, %c896_85], %173 {strides = array<i32>} : memref<64x1152xbf16, #tpu.memory_space<vmem>>, vector<8x128xbf16>,
    %175 = vector.extract_strided_slice %168 {offsets = [2, 0], sizes = [8, 128], strides = [1, 1]} : vector<10x128xf32> to vector<8x128xf32>
    %176 = arith.truncf %175 : vector<8x128xf32> to vector<8x128xbf16>
    %c32_86 = arith.constant 32 : index
    %c1024_87 = arith.constant 1024 : index
    %177 = vector.load %arg9[%c32_86, %c1024_87] : memref<64x1152xbf16, #tpu.memory_space<vmem>>, vector<8x128xbf16>
    tpu.vector_store %arg9[%c32_86, %c1024_87], %176 {strides = array<i32>} : memref<64x1152xbf16, #tpu.memory_space<vmem>>, vector<8x128xbf16>,
    %178 = vector.extract_strided_slice %13 {offsets = [4, 0, 0], sizes = [1, 10, 128], strides = [1, 1, 1]} : vector<8x10x128xf32> to vector<1x10x128xf32>
    %179 = vector.shape_cast %178 : vector<1x10x128xf32> to vector<10x128xf32>
    %180 = vector.extract_strided_slice %179 {offsets = [0, 0], sizes = [8, 128], strides = [1, 1]} : vector<10x128xf32> to vector<8x128xf32>
    %181 = arith.truncf %180 : vector<8x128xf32> to vector<8x128xbf16>
    %c40 = arith.constant 40 : index
    %c0_88 = arith.constant 0 : index
    %182 = vector.load %arg9[%c40, %c0_88] : memref<64x1152xbf16, #tpu.memory_space<vmem>>, vector<8x128xbf16>
    tpu.vector_store %arg9[%c40, %c0_88], %181 {strides = array<i32>} : memref<64x1152xbf16, #tpu.memory_space<vmem>>, vector<8x128xbf16>,
    %183 = vector.extract_strided_slice %179 {offsets = [1, 0], sizes = [8, 128], strides = [1, 1]} : vector<10x128xf32> to vector<8x128xf32>
    %184 = arith.truncf %183 : vector<8x128xf32> to vector<8x128xbf16>
    %c40_89 = arith.constant 40 : index
    %c128_90 = arith.constant 128 : index
    %185 = vector.load %arg9[%c40_89, %c128_90] : memref<64x1152xbf16, #tpu.memory_space<vmem>>, vector<8x128xbf16>
    tpu.vector_store %arg9[%c40_89, %c128_90], %184 {strides = array<i32>} : memref<64x1152xbf16, #tpu.memory_space<vmem>>, vector<8x128xbf16>,
    %186 = vector.extract_strided_slice %179 {offsets = [2, 0], sizes = [8, 128], strides = [1, 1]} : vector<10x128xf32> to vector<8x128xf32>
    %187 = arith.truncf %186 : vector<8x128xf32> to vector<8x128xbf16>
    %c40_91 = arith.constant 40 : index
    %c256_92 = arith.constant 256 : index
    %188 = vector.load %arg9[%c40_91, %c256_92] : memref<64x1152xbf16, #tpu.memory_space<vmem>>, vector<8x128xbf16>
    tpu.vector_store %arg9[%c40_91, %c256_92], %187 {strides = array<i32>} : memref<64x1152xbf16, #tpu.memory_space<vmem>>, vector<8x128xbf16>,
    %189 = vector.extract_strided_slice %13 {offsets = [5, 0, 0], sizes = [1, 10, 128], strides = [1, 1, 1]} : vector<8x10x128xf32> to vector<1x10x128xf32>
    %190 = vector.shape_cast %189 : vector<1x10x128xf32> to vector<10x128xf32>
    %191 = vector.extract_strided_slice %190 {offsets = [0, 0], sizes = [8, 128], strides = [1, 1]} : vector<10x128xf32> to vector<8x128xf32>
    %192 = arith.truncf %191 : vector<8x128xf32> to vector<8x128xbf16>
    %c40_93 = arith.constant 40 : index
    %c384_94 = arith.constant 384 : index
    %193 = vector.load %arg9[%c40_93, %c384_94] : memref<64x1152xbf16, #tpu.memory_space<vmem>>, vector<8x128xbf16>
    tpu.vector_store %arg9[%c40_93, %c384_94], %192 {strides = array<i32>} : memref<64x1152xbf16, #tpu.memory_space<vmem>>, vector<8x128xbf16>,
    %194 = vector.extract_strided_slice %190 {offsets = [1, 0], sizes = [8, 128], strides = [1, 1]} : vector<10x128xf32> to vector<8x128xf32>
    %195 = arith.truncf %194 : vector<8x128xf32> to vector<8x128xbf16>
    %c40_95 = arith.constant 40 : index
    %c512_96 = arith.constant 512 : index
    %196 = vector.load %arg9[%c40_95, %c512_96] : memref<64x1152xbf16, #tpu.memory_space<vmem>>, vector<8x128xbf16>
    tpu.vector_store %arg9[%c40_95, %c512_96], %195 {strides = array<i32>} : memref<64x1152xbf16, #tpu.memory_space<vmem>>, vector<8x128xbf16>,
    %197 = vector.extract_strided_slice %190 {offsets = [2, 0], sizes = [8, 128], strides = [1, 1]} : vector<10x128xf32> to vector<8x128xf32>
    %198 = arith.truncf %197 : vector<8x128xf32> to vector<8x128xbf16>
    %c40_97 = arith.constant 40 : index
    %c640_98 = arith.constant 640 : index
    %199 = vector.load %arg9[%c40_97, %c640_98] : memref<64x1152xbf16, #tpu.memory_space<vmem>>, vector<8x128xbf16>
    tpu.vector_store %arg9[%c40_97, %c640_98], %198 {strides = array<i32>} : memref<64x1152xbf16, #tpu.memory_space<vmem>>, vector<8x128xbf16>,
    %200 = vector.extract_strided_slice %13 {offsets = [6, 0, 0], sizes = [1, 10, 128], strides = [1, 1, 1]} : vector<8x10x128xf32> to vector<1x10x128xf32>
    %201 = vector.shape_cast %200 : vector<1x10x128xf32> to vector<10x128xf32>
    %202 = vector.extract_strided_slice %201 {offsets = [0, 0], sizes = [8, 128], strides = [1, 1]} : vector<10x128xf32> to vector<8x128xf32>
    %203 = arith.truncf %202 : vector<8x128xf32> to vector<8x128xbf16>
    %c40_99 = arith.constant 40 : index
    %c768_100 = arith.constant 768 : index
    %204 = vector.load %arg9[%c40_99, %c768_100] : memref<64x1152xbf16, #tpu.memory_space<vmem>>, vector<8x128xbf16>
    tpu.vector_store %arg9[%c40_99, %c768_100], %203 {strides = array<i32>} : memref<64x1152xbf16, #tpu.memory_space<vmem>>, vector<8x128xbf16>,
    %205 = vector.extract_strided_slice %201 {offsets = [1, 0], sizes = [8, 128], strides = [1, 1]} : vector<10x128xf32> to vector<8x128xf32>
    %206 = arith.truncf %205 : vector<8x128xf32> to vector<8x128xbf16>
    %c40_101 = arith.constant 40 : index
    %c896_102 = arith.constant 896 : index
    %207 = vector.load %arg9[%c40_101, %c896_102] : memref<64x1152xbf16, #tpu.memory_space<vmem>>, vector<8x128xbf16>
    tpu.vector_store %arg9[%c40_101, %c896_102], %206 {strides = array<i32>} : memref<64x1152xbf16, #tpu.memory_space<vmem>>, vector<8x128xbf16>,
    %208 = vector.extract_strided_slice %201 {offsets = [2, 0], sizes = [8, 128], strides = [1, 1]} : vector<10x128xf32> to vector<8x128xf32>
    %209 = arith.truncf %208 : vector<8x128xf32> to vector<8x128xbf16>
    %c40_103 = arith.constant 40 : index
    %c1024_104 = arith.constant 1024 : index
    %210 = vector.load %arg9[%c40_103, %c1024_104] : memref<64x1152xbf16, #tpu.memory_space<vmem>>, vector<8x128xbf16>
    tpu.vector_store %arg9[%c40_103, %c1024_104], %209 {strides = array<i32>} : memref<64x1152xbf16, #tpu.memory_space<vmem>>, vector<8x128xbf16>,
    %211 = vector.extract_strided_slice %13 {offsets = [5, 0, 0], sizes = [1, 10, 128], strides = [1, 1, 1]} : vector<8x10x128xf32> to vector<1x10x128xf32>
    %212 = vector.shape_cast %211 : vector<1x10x128xf32> to vector<10x128xf32>
    %213 = vector.extract_strided_slice %212 {offsets = [0, 0], sizes = [8, 128], strides = [1, 1]} : vector<10x128xf32> to vector<8x128xf32>
    %214 = arith.truncf %213 : vector<8x128xf32> to vector<8x128xbf16>
    %c48 = arith.constant 48 : index
    %c0_105 = arith.constant 0 : index
    %215 = vector.load %arg9[%c48, %c0_105] : memref<64x1152xbf16, #tpu.memory_space<vmem>>, vector<8x128xbf16>
    tpu.vector_store %arg9[%c48, %c0_105], %214 {strides = array<i32>} : memref<64x1152xbf16, #tpu.memory_space<vmem>>, vector<8x128xbf16>,
    %216 = vector.extract_strided_slice %212 {offsets = [1, 0], sizes = [8, 128], strides = [1, 1]} : vector<10x128xf32> to vector<8x128xf32>
    %217 = arith.truncf %216 : vector<8x128xf32> to vector<8x128xbf16>
    %c48_106 = arith.constant 48 : index
    %c128_107 = arith.constant 128 : index
    %218 = vector.load %arg9[%c48_106, %c128_107] : memref<64x1152xbf16, #tpu.memory_space<vmem>>, vector<8x128xbf16>
    tpu.vector_store %arg9[%c48_106, %c128_107], %217 {strides = array<i32>} : memref<64x1152xbf16, #tpu.memory_space<vmem>>, vector<8x128xbf16>,
    %219 = vector.extract_strided_slice %212 {offsets = [2, 0], sizes = [8, 128], strides = [1, 1]} : vector<10x128xf32> to vector<8x128xf32>
    %220 = arith.truncf %219 : vector<8x128xf32> to vector<8x128xbf16>
    %c48_108 = arith.constant 48 : index
    %c256_109 = arith.constant 256 : index
    %221 = vector.load %arg9[%c48_108, %c256_109] : memref<64x1152xbf16, #tpu.memory_space<vmem>>, vector<8x128xbf16>
    tpu.vector_store %arg9[%c48_108, %c256_109], %220 {strides = array<i32>} : memref<64x1152xbf16, #tpu.memory_space<vmem>>, vector<8x128xbf16>,
    %222 = vector.extract_strided_slice %13 {offsets = [6, 0, 0], sizes = [1, 10, 128], strides = [1, 1, 1]} : vector<8x10x128xf32> to vector<1x10x128xf32>
    %223 = vector.shape_cast %222 : vector<1x10x128xf32> to vector<10x128xf32>
    %224 = vector.extract_strided_slice %223 {offsets = [0, 0], sizes = [8, 128], strides = [1, 1]} : vector<10x128xf32> to vector<8x128xf32>
    %225 = arith.truncf %224 : vector<8x128xf32> to vector<8x128xbf16>
    %c48_110 = arith.constant 48 : index
    %c384_111 = arith.constant 384 : index
    %226 = vector.load %arg9[%c48_110, %c384_111] : memref<64x1152xbf16, #tpu.memory_space<vmem>>, vector<8x128xbf16>
    tpu.vector_store %arg9[%c48_110, %c384_111], %225 {strides = array<i32>} : memref<64x1152xbf16, #tpu.memory_space<vmem>>, vector<8x128xbf16>,
    %227 = vector.extract_strided_slice %223 {offsets = [1, 0], sizes = [8, 128], strides = [1, 1]} : vector<10x128xf32> to vector<8x128xf32>
    %228 = arith.truncf %227 : vector<8x128xf32> to vector<8x128xbf16>
    %c48_112 = arith.constant 48 : index
    %c512_113 = arith.constant 512 : index
    %229 = vector.load %arg9[%c48_112, %c512_113] : memref<64x1152xbf16, #tpu.memory_space<vmem>>, vector<8x128xbf16>
    tpu.vector_store %arg9[%c48_112, %c512_113], %228 {strides = array<i32>} : memref<64x1152xbf16, #tpu.memory_space<vmem>>, vector<8x128xbf16>,
    %230 = vector.extract_strided_slice %223 {offsets = [2, 0], sizes = [8, 128], strides = [1, 1]} : vector<10x128xf32> to vector<8x128xf32>
    %231 = arith.truncf %230 : vector<8x128xf32> to vector<8x128xbf16>
    %c48_114 = arith.constant 48 : index
    %c640_115 = arith.constant 640 : index
    %232 = vector.load %arg9[%c48_114, %c640_115] : memref<64x1152xbf16, #tpu.memory_space<vmem>>, vector<8x128xbf16>
    tpu.vector_store %arg9[%c48_114, %c640_115], %231 {strides = array<i32>} : memref<64x1152xbf16, #tpu.memory_space<vmem>>, vector<8x128xbf16>,
    %233 = vector.extract_strided_slice %13 {offsets = [7, 0, 0], sizes = [1, 10, 128], strides = [1, 1, 1]} : vector<8x10x128xf32> to vector<1x10x128xf32>
    %234 = vector.shape_cast %233 : vector<1x10x128xf32> to vector<10x128xf32>
    %235 = vector.extract_strided_slice %234 {offsets = [0, 0], sizes = [8, 128], strides = [1, 1]} : vector<10x128xf32> to vector<8x128xf32>
    %236 = arith.truncf %235 : vector<8x128xf32> to vector<8x128xbf16>
    %c48_116 = arith.constant 48 : index
    %c768_117 = arith.constant 768 : index
    %237 = vector.load %arg9[%c48_116, %c768_117] : memref<64x1152xbf16, #tpu.memory_space<vmem>>, vector<8x128xbf16>
    tpu.vector_store %arg9[%c48_116, %c768_117], %236 {strides = array<i32>} : memref<64x1152xbf16, #tpu.memory_space<vmem>>, vector<8x128xbf16>,
    %238 = vector.extract_strided_slice %234 {offsets = [1, 0], sizes = [8, 128], strides = [1, 1]} : vector<10x128xf32> to vector<8x128xf32>
    %239 = arith.truncf %238 : vector<8x128xf32> to vector<8x128xbf16>
    %c48_118 = arith.constant 48 : index
    %c896_119 = arith.constant 896 : index
    %240 = vector.load %arg9[%c48_118, %c896_119] : memref<64x1152xbf16, #tpu.memory_space<vmem>>, vector<8x128xbf16>
    tpu.vector_store %arg9[%c48_118, %c896_119], %239 {strides = array<i32>} : memref<64x1152xbf16, #tpu.memory_space<vmem>>, vector<8x128xbf16>,
    %241 = vector.extract_strided_slice %234 {offsets = [2, 0], sizes = [8, 128], strides = [1, 1]} : vector<10x128xf32> to vector<8x128xf32>
    %242 = arith.truncf %241 : vector<8x128xf32> to vector<8x128xbf16>
    %c48_120 = arith.constant 48 : index
    %c1024_121 = arith.constant 1024 : index
    %243 = vector.load %arg9[%c48_120, %c1024_121] : memref<64x1152xbf16, #tpu.memory_space<vmem>>, vector<8x128xbf16>
    tpu.vector_store %arg9[%c48_120, %c1024_121], %242 {strides = array<i32>} : memref<64x1152xbf16, #tpu.memory_space<vmem>>, vector<8x128xbf16>,
    %244 = vector.extract_strided_slice %13 {offsets = [6, 0, 0], sizes = [1, 10, 128], strides = [1, 1, 1]} : vector<8x10x128xf32> to vector<1x10x128xf32>
    %245 = vector.shape_cast %244 : vector<1x10x128xf32> to vector<10x128xf32>
    %246 = vector.extract_strided_slice %245 {offsets = [0, 0], sizes = [8, 128], strides = [1, 1]} : vector<10x128xf32> to vector<8x128xf32>
    %247 = arith.truncf %246 : vector<8x128xf32> to vector<8x128xbf16>
    %c56 = arith.constant 56 : index
    %c0_122 = arith.constant 0 : index
    %248 = vector.load %arg9[%c56, %c0_122] : memref<64x1152xbf16, #tpu.memory_space<vmem>>, vector<8x128xbf16>
    tpu.vector_store %arg9[%c56, %c0_122], %247 {strides = array<i32>} : memref<64x1152xbf16, #tpu.memory_space<vmem>>, vector<8x128xbf16>,
    %249 = vector.extract_strided_slice %245 {offsets = [1, 0], sizes = [8, 128], strides = [1, 1]} : vector<10x128xf32> to vector<8x128xf32>
    %250 = arith.truncf %249 : vector<8x128xf32> to vector<8x128xbf16>
    %c56_123 = arith.constant 56 : index
    %c128_124 = arith.constant 128 : index
    %251 = vector.load %arg9[%c56_123, %c128_124] : memref<64x1152xbf16, #tpu.memory_space<vmem>>, vector<8x128xbf16>
    tpu.vector_store %arg9[%c56_123, %c128_124], %250 {strides = array<i32>} : memref<64x1152xbf16, #tpu.memory_space<vmem>>, vector<8x128xbf16>,
    %252 = vector.extract_strided_slice %245 {offsets = [2, 0], sizes = [8, 128], strides = [1, 1]} : vector<10x128xf32> to vector<8x128xf32>
    %253 = arith.truncf %252 : vector<8x128xf32> to vector<8x128xbf16>
    %c56_125 = arith.constant 56 : index
    %c256_126 = arith.constant 256 : index
    %254 = vector.load %arg9[%c56_125, %c256_126] : memref<64x1152xbf16, #tpu.memory_space<vmem>>, vector<8x128xbf16>
    tpu.vector_store %arg9[%c56_125, %c256_126], %253 {strides = array<i32>} : memref<64x1152xbf16, #tpu.memory_space<vmem>>, vector<8x128xbf16>,
    %255 = vector.extract_strided_slice %13 {offsets = [7, 0, 0], sizes = [1, 10, 128], strides = [1, 1, 1]} : vector<8x10x128xf32> to vector<1x10x128xf32>
    %256 = vector.shape_cast %255 : vector<1x10x128xf32> to vector<10x128xf32>
    %257 = vector.extract_strided_slice %256 {offsets = [0, 0], sizes = [8, 128], strides = [1, 1]} : vector<10x128xf32> to vector<8x128xf32>
    %258 = arith.truncf %257 : vector<8x128xf32> to vector<8x128xbf16>
    %c56_127 = arith.constant 56 : index
    %c384_128 = arith.constant 384 : index
    %259 = vector.load %arg9[%c56_127, %c384_128] : memref<64x1152xbf16, #tpu.memory_space<vmem>>, vector<8x128xbf16>
    tpu.vector_store %arg9[%c56_127, %c384_128], %258 {strides = array<i32>} : memref<64x1152xbf16, #tpu.memory_space<vmem>>, vector<8x128xbf16>,
    %260 = vector.extract_strided_slice %256 {offsets = [1, 0], sizes = [8, 128], strides = [1, 1]} : vector<10x128xf32> to vector<8x128xf32>
    %261 = arith.truncf %260 : vector<8x128xf32> to vector<8x128xbf16>
    %c56_129 = arith.constant 56 : index
    %c512_130 = arith.constant 512 : index
    %262 = vector.load %arg9[%c56_129, %c512_130] : memref<64x1152xbf16, #tpu.memory_space<vmem>>, vector<8x128xbf16>
    tpu.vector_store %arg9[%c56_129, %c512_130], %261 {strides = array<i32>} : memref<64x1152xbf16, #tpu.memory_space<vmem>>, vector<8x128xbf16>,
    %263 = vector.extract_strided_slice %256 {offsets = [2, 0], sizes = [8, 128], strides = [1, 1]} : vector<10x128xf32> to vector<8x128xf32>
    %264 = arith.truncf %263 : vector<8x128xf32> to vector<8x128xbf16>
    %c56_131 = arith.constant 56 : index
    %c640_132 = arith.constant 640 : index
    %265 = vector.load %arg9[%c56_131, %c640_132] : memref<64x1152xbf16, #tpu.memory_space<vmem>>, vector<8x128xbf16>
    tpu.vector_store %arg9[%c56_131, %c640_132], %264 {strides = array<i32>} : memref<64x1152xbf16, #tpu.memory_space<vmem>>, vector<8x128xbf16>,
    %266 = vector.extract_strided_slice %14 {offsets = [0, 0], sizes = [8, 128], strides = [1, 1]} : vector<10x128xf32> to vector<8x128xf32>
    %267 = arith.truncf %266 : vector<8x128xf32> to vector<8x128xbf16>
    %c56_133 = arith.constant 56 : index
    %c768_134 = arith.constant 768 : index
    %268 = vector.load %arg9[%c56_133, %c768_134] : memref<64x1152xbf16, #tpu.memory_space<vmem>>, vector<8x128xbf16>
    tpu.vector_store %arg9[%c56_133, %c768_134], %267 {strides = array<i32>} : memref<64x1152xbf16, #tpu.memory_space<vmem>>, vector<8x128xbf16>,
    %269 = vector.extract_strided_slice %14 {offsets = [1, 0], sizes = [8, 128], strides = [1, 1]} : vector<10x128xf32> to vector<8x128xf32>
    %270 = arith.truncf %269 : vector<8x128xf32> to vector<8x128xbf16>
    %c56_135 = arith.constant 56 : index
    %c896_136 = arith.constant 896 : index
    %271 = vector.load %arg9[%c56_135, %c896_136] : memref<64x1152xbf16, #tpu.memory_space<vmem>>, vector<8x128xbf16>
    tpu.vector_store %arg9[%c56_135, %c896_136], %270 {strides = array<i32>} : memref<64x1152xbf16, #tpu.memory_space<vmem>>, vector<8x128xbf16>,
    %272 = vector.extract_strided_slice %14 {offsets = [2, 0], sizes = [8, 128], strides = [1, 1]} : vector<10x128xf32> to vector<8x128xf32>
    %273 = arith.truncf %272 : vector<8x128xf32> to vector<8x128xbf16>
    %c56_137 = arith.constant 56 : index
    %c1024_138 = arith.constant 1024 : index
    %274 = vector.load %arg9[%c56_137, %c1024_138] : memref<64x1152xbf16, #tpu.memory_space<vmem>>, vector<8x128xbf16>
    tpu.vector_store %arg9[%c56_137, %c1024_138], %273 {strides = array<i32>} : memref<64x1152xbf16, #tpu.memory_space<vmem>>, vector<8x128xbf16>,
    %c0_139 = arith.constant 0 : index
    %c0_140 = arith.constant 0 : index
    %275 = vector.load %arg9[%c0_139, %c0_140] : memref<64x1152xbf16, #tpu.memory_space<vmem>>, vector<64x1152xbf16>
    %c0_141 = arith.constant 0 : index
    %c0_142 = arith.constant 0 : index
    %276 = vector.load %arg4[%c0_141, %c0_142] : memref<1152x128xbf16, #tpu.memory_space<vmem>>, vector<1152x128xbf16>
    %cst_143 = arith.constant dense<0.000000e+00> : vector<64x128xf32>
    %277 = tpu.matmul %275, %276, %cst_143 {dimension_numbers = #tpu.dot_dimension_numbers<[1], [0], [0], [1], [0, 0, 1, 1], [], []>} : vector<64x1152xbf16>, vector<1152x128xbf16>, vector<64x128xf32> -> vector<64x128xf32>
    %c0_144 = arith.constant 0 : index
    %c0_145 = arith.constant 0 : index
    %278 = vector.load %arg5[%c0_144, %c0_145] : memref<1x128xf32, #tpu.memory_space<vmem>>, vector<1x128xf32>
    %279 = vector.broadcast %278 : vector<1x128xf32> to vector<64x128xf32>
    %280 = arith.addf %277, %279 : vector<64x128xf32>
    %cst_146 = arith.constant 0.000000e+00 : f32
    %281 = vector.broadcast %cst_146 : f32 to vector<64x128xf32>
    %282 = arith.maximumf %280, %281 : vector<64x128xf32>
    %283 = arith.truncf %282 : vector<64x128xf32> to vector<64x128xbf16>
    %c0_147 = arith.constant 0 : index
    %c0_148 = arith.constant 0 : index
    %284 = vector.load %arg6[%c0_147, %c0_148] : memref<128x128xbf16, #tpu.memory_space<vmem>>, vector<128x128xbf16>
    %cst_149 = arith.constant dense<0.000000e+00> : vector<64x128xf32>
    %285 = tpu.matmul %283, %284, %cst_149 {dimension_numbers = #tpu.dot_dimension_numbers<[1], [0], [0], [1], [0, 0, 1, 1], [], []>} : vector<64x128xbf16>, vector<128x128xbf16>, vector<64x128xf32> -> vector<64x128xf32>
    %c0_150 = arith.constant 0 : index
    %c0_151 = arith.constant 0 : index
    %286 = vector.load %arg7[%c0_150, %c0_151] : memref<1x128xf32, #tpu.memory_space<vmem>>, vector<1x128xf32>
    %287 = vector.broadcast %286 : vector<1x128xf32> to vector<64x128xf32>
    %288 = arith.addf %285, %287 : vector<64x128xf32>
    %289 = arith.addf %288, %2 : vector<64x128xf32>
    %cst_152 = arith.constant 0.000000e+00 : f32
    %290 = vector.broadcast %cst_152 : f32 to vector<64x128xf32>
    %291 = arith.maximumf %289, %290 : vector<64x128xf32>
    %292 = vector.shape_cast %291 : vector<64x128xf32> to vector<8x8x128xf32>
    %c0_153 = arith.constant 0 : index
    %c0_154 = arith.constant 0 : index
    %c0_155 = arith.constant 0 : index
    %c0_156 = arith.constant 0 : index
    %293 = vector.load %arg8[%c0_153, %c0_154, %c0_155, %c0_156] : memref<1x8x8x128xf32, #tpu.memory_space<vmem>>, vector<1x8x8x128xf32>
    %294 = vector.shape_cast %293 : vector<1x8x8x128xf32> to vector<8x8x128xf32>
    %295 = vector.shape_cast %292 : vector<8x8x128xf32> to vector<1x8x8x128xf32>
    tpu.vector_store %arg8[%c0_153, %c0_154, %c0_155, %c0_156], %295 {strides = array<i32>} : memref<1x8x8x128xf32, #tpu.memory_space<vmem>>, vector<1x8x8x128xf32>,
    return
  }
  func.func @transform_0(%arg0: i32) -> (i32, i32, i32, i32) {
    %c0_i32 = arith.constant 0 : i32
    %c0_i32_0 = arith.constant 0 : i32
    %c0_i32_1 = arith.constant 0 : i32
    %c0_i32_2 = arith.constant 0 : i32
    return %arg0, %c0_i32, %c0_i32_0, %c0_i32_1 : i32, i32, i32, i32
  }
  func.func @transform_1(%arg0: i32) -> (i32, i32) {
    %c0_i32 = arith.constant 0 : i32
    %c0_i32_0 = arith.constant 0 : i32
    %c0_i32_1 = arith.constant 0 : i32
    return %c0_i32, %c0_i32_0 : i32, i32
  }
  func.func @transform_2(%arg0: i32) -> (i32, i32) {
    %c0_i32 = arith.constant 0 : i32
    %c0_i32_0 = arith.constant 0 : i32
    %c0_i32_1 = arith.constant 0 : i32
    return %c0_i32, %c0_i32_0 : i32, i32
  }
  func.func @transform_3(%arg0: i32) -> (i32, i32) {
    %c0_i32 = arith.constant 0 : i32
    %c0_i32_0 = arith.constant 0 : i32
    %c0_i32_1 = arith.constant 0 : i32
    return %c0_i32, %c0_i32_0 : i32, i32
  }
  func.func @transform_4(%arg0: i32) -> (i32, i32) {
    %c0_i32 = arith.constant 0 : i32
    %c0_i32_0 = arith.constant 0 : i32
    %c0_i32_1 = arith.constant 0 : i32
    return %c0_i32, %c0_i32_0 : i32, i32
  }
  func.func @transform_5(%arg0: i32) -> (i32, i32) {
    %c0_i32 = arith.constant 0 : i32
    %c0_i32_0 = arith.constant 0 : i32
    %c0_i32_1 = arith.constant 0 : i32
    return %c0_i32, %c0_i32_0 : i32, i32
  }
  func.func @transform_6(%arg0: i32) -> (i32, i32) {
    %c0_i32 = arith.constant 0 : i32
    %c0_i32_0 = arith.constant 0 : i32
    %c0_i32_1 = arith.constant 0 : i32
    return %c0_i32, %c0_i32_0 : i32, i32
  }
  func.func @transform_7(%arg0: i32) -> (i32, i32, i32, i32) {
    %c0_i32 = arith.constant 0 : i32
    %c0_i32_0 = arith.constant 0 : i32
    %c0_i32_1 = arith.constant 0 : i32
    %c0_i32_2 = arith.constant 0 : i32
    return %arg0, %c0_i32, %c0_i32_0, %c0_i32_1 : i32, i32, i32, i32
  }
}

</mosaic_0001>

<llo_original>
// kernel: tpu_custom_call.1
$region0: #{tpu_custom_call.1}
  #allocation0 [shape = 'u32[]', space=smem, size = 0x4, offset = 0x4, fixed_abs, tag = 'smem constant byte address 0x4 - core index']
  #allocation1 [shape = 'u32[144,128]{1,0:T(1,128)}', space=vmem, size = 0x12000, scoped, tag = 'internal scratch']
  #allocation2 [shape = 'bf16[64,1152]{1,0:T(16,128)(2,1)}', space=vmem, size = 0x24000, scoped, tag = 'scratch operand']
  %s0 = inlined_call_operand.hbm [shape: f32[2,8,8,128], index: 0, kind: input, shape index: {}]
  %s1 = inlined_call_operand.hbm [shape: bf16[128,128], index: 1, kind: input, shape index: {}]
  %s2 = inlined_call_operand.vmem [shape: f32[1,128], index: 2, kind: input, shape index: {}]
  %s3 = inlined_call_operand.hbm [shape: bf16[1152,128], index: 3, kind: input, shape index: {}]
  %s4 = inlined_call_operand.vmem [shape: f32[1,128], index: 4, kind: input, shape index: {}]
  %s5 = inlined_call_operand.hbm [shape: bf16[128,128], index: 5, kind: input, shape index: {}]
  %s6 = inlined_call_operand.vmem [shape: f32[1,128], index: 6, kind: input, shape index: {}]
  %s7 = inlined_call_operand.hbm [shape: f32[2,8,8,128], index: 7, kind: output, shape index: {}]
  %s8 = sld [smem:[#allocation0]]
  $region77: #{tpu_custom_call.1} parent=0
    _
  %s10 = ssub.s32 1, %s8
  %s11 = scalar_select 0, %s10, %s8
  $region1: #{tpu_custom_call.1} parent=0
    #allocation3 [shape = 'u8[65536]{0}', space=vmem, size = 0x10000, scoped, tag = 'input window, operand 0']
    #allocation4 [shape = 's32[2]{0}', space=sflag, size = 0x8, scoped, tag = 'scoped memory for tpu_custom_call.1']
    #allocation5 [shape = 's32[2]{0}', space=sflag, size = 0x8, scoped, tag = 'scoped memory for tpu_custom_call.1']
    #allocation6 [shape = 'u8[32768]{0}', space=vmem, size = 0x8000, scoped, tag = 'input window, operand 1, single buffered']
    #allocation7 [shape = 's32[1]{0}', space=sflag, size = 0x4, scoped, tag = 'scoped memory for tpu_custom_call.1']
    #allocation8 [shape = 'u8[294912]{0}', space=vmem, size = 0x48000, scoped, tag = 'input window, operand 3, single buffered']
    #allocation9 [shape = 'u8[32768]{0}', space=vmem, size = 0x8000, scoped, tag = 'input window, operand 5, single buffered']
    #allocation10 [shape = 's32[1]{0}', space=sflag, size = 0x4, scoped, tag = 'scoped memory for tpu_custom_call.1']
    #allocation11 [shape = 'u8[65536]{0}', space=vmem, size = 0x10000, scoped, tag = 'output window, operand 0']
    %12 = vsyncpa [#allocation4], 0
    %s13 = scalar_lea.sflag [#allocation4], 1
    %14 = vsyncpa %s13, 0
    %15 = vsyncpa [#allocation7], 0
    %16 = vsyncpa [#allocation10], 0
    %17 = vsyncpa [#allocation5], 0
    %s18 = scalar_lea.sflag [#allocation5], 1
    %19 = vsyncpa %s18, 0
    loop: start=0, step=1, limit=4
    $region2: #{tpu_custom_call.1} parent=1 // loop_pre_header
      _
    $region3: #{tpu_custom_call.1} parent=1 // loop_header
      %s21 = sphi 0, %s25
      %p22 = scmp.ge.s32.totalorder %s21, 4
      %s31 = sphi 0, %s33
      %s34 = sphi 0, %s31
      %s35 = sphi 0, %s34
      %s51 = sphi 0, %s35
      %s55 = sphi 0, %s55
      %s57 = sphi 0, %s55
      %s58 = sphi 0, %s57
      %s72 = sphi 0, %s58
      %s76 = sphi 0, %s76
      %s78 = sphi 0, %s76
      %s79 = sphi 0, %s78
      %s93 = sphi 0, %s79
      %s97 = sphi 0, %s97
      %s99 = sphi 0, %s97
      %s100 = sphi 0, %s99
      %s114 = sphi 0, %s100
      %s118 = sphi 0, %s118
      %s120 = sphi 0, %s118
      %s121 = sphi 0, %s120
      %s135 = sphi 0, %s121
      %s139 = sphi 0, %s139
      %s141 = sphi 0, %s139
      %s142 = sphi 0, %s141
      %s156 = sphi 0, %s142
      %s160 = sphi 0, %s160
      %s162 = sphi 0, %s160
      %s163 = sphi 0, %s162
      %s177 = sphi 0, %s163
      %s183 = sphi 0, %s185
      %s186 = sphi 0, %s183
      %s187 = sphi 0, %s186
      %s203 = sphi 0, %s187
    $region4: #{tpu_custom_call.1} parent=1 // loop_header_branch
      %24 = sbr.rel (%p22) target = $region8
    $region5: #{tpu_custom_call.1} parent=1 // loop_body
      %s26 = ssub.s32 %s21, 1
      %s27 = ssub.s32 %s21, 2
      %s28 = sadd.s32 %s21, 1
      %s29 = ssub.s32 %s21, %s28
      %p30 = scmp.eq.s32.totalorder %s29, 0
      %s32 = sadd.s32 %s31, 1
      %s33 = scalar_select %p30, %s31, %s32
      %p36 = pneg %p30
      %p37 = scmp.eq.s32.totalorder %s21, 1
      %p38 = por %p36, %p37
      %p39 = scmp.ne.s32.totalorder %s31, %s34
      %p40 = scmp.eq.s32.totalorder %s21, 0
      %p41 = por %p39, %p40
      %p42 = scmp.ne.s32.totalorder %s31, %s34
      %p43 = scmp.eq.s32.totalorder %s26, 1
      %p44 = por %p42, %p43
      %p45 = scmp.ne.s32.totalorder %s34, %s35
      %p46 = scmp.eq.s32.totalorder %s26, 0
      %p47 = por %p45, %p46
      %p48 = scmp.ne.s32.totalorder %s34, %s35
      %p49 = scmp.eq.s32.totalorder %s27, 1
      %p50 = por %p48, %p49
      %p52 = scmp.ne.s32.totalorder %s35, %s51
      %p53 = scmp.eq.s32.totalorder %s27, 0
      %p54 = por %p52, %p53
      %s56 = sadd.s32 %s55, 1
      %p59 = scmp.eq.s32.totalorder %s21, 1
      %p60 = scmp.ne.s32.totalorder %s55, %s57
      %p61 = scmp.eq.s32.totalorder %s21, 0
      %p62 = por %p60, %p61
      %p63 = scmp.ne.s32.totalorder %s55, %s57
      %p64 = scmp.eq.s32.totalorder %s26, 1
      %p65 = por %p63, %p64
      %p66 = scmp.ne.s32.totalorder %s57, %s58
      %p67 = scmp.eq.s32.totalorder %s26, 0
      %p68 = por %p66, %p67
      %p69 = scmp.ne.s32.totalorder %s57, %s58
      %p70 = scmp.eq.s32.totalorder %s27, 1
      %p71 = por %p69, %p70
      %p73 = scmp.ne.s32.totalorder %s58, %s72
      %p74 = scmp.eq.s32.totalorder %s27, 0
      %p75 = por %p73, %p74
      %s77 = sadd.s32 %s76, 1
      %p80 = scmp.eq.s32.totalorder %s21, 1
      %p81 = scmp.ne.s32.totalorder %s76, %s78
      %p82 = scmp.eq.s32.totalorder %s21, 0
      %p83 = por %p81, %p82
      %p84 = scmp.ne.s32.totalorder %s76, %s78
      %p85 = scmp.eq.s32.totalorder %s26, 1
      %p86 = por %p84, %p85
      %p87 = scmp.ne.s32.totalorder %s78, %s79
      %p88 = scmp.eq.s32.totalorder %s26, 0
      %p89 = por %p87, %p88
      %p90 = scmp.ne.s32.totalorder %s78, %s79
      %p91 = scmp.eq.s32.totalorder %s27, 1
      %p92 = por %p90, %p91
      %p94 = scmp.ne.s32.totalorder %s79, %s93
      %p95 = scmp.eq.s32.totalorder %s27, 0
      %p96 = por %p94, %p95
      %s98 = sadd.s32 %s97, 1
      %p101 = scmp.eq.s32.totalorder %s21, 1
      %p102 = scmp.ne.s32.totalorder %s97, %s99
      %p103 = scmp.eq.s32.totalorder %s21, 0
      %p104 = por %p102, %p103
      %p105 = scmp.ne.s32.totalorder %s97, %s99
      %p106 = scmp.eq.s32.totalorder %s26, 1
      %p107 = por %p105, %p106
      %p108 = scmp.ne.s32.totalorder %s99, %s100
      %p109 = scmp.eq.s32.totalorder %s26, 0
      %p110 = por %p108, %p109
      %p111 = scmp.ne.s32.totalorder %s99, %s100
      %p112 = scmp.eq.s32.totalorder %s27, 1
      %p113 = por %p111, %p112
      %p115 = scmp.ne.s32.totalorder %s100, %s114
      %p116 = scmp.eq.s32.totalorder %s27, 0
      %p117 = por %p115, %p116
      %s119 = sadd.s32 %s118, 1
      %p122 = scmp.eq.s32.totalorder %s21, 1
      %p123 = scmp.ne.s32.totalorder %s118, %s120
      %p124 = scmp.eq.s32.totalorder %s21, 0
      %p125 = por %p123, %p124
      %p126 = scmp.ne.s32.totalorder %s118, %s120
      %p127 = scmp.eq.s32.totalorder %s26, 1
      %p128 = por %p126, %p127
      %p129 = scmp.ne.s32.totalorder %s120, %s121
      %p130 = scmp.eq.s32.totalorder %s26, 0
      %p131 = por %p129, %p130
      %p132 = scmp.ne.s32.totalorder %s120, %s121
      %p133 = scmp.eq.s32.totalorder %s27, 1
      %p134 = por %p132, %p133
      %p136 = scmp.ne.s32.totalorder %s121, %s135
      %p137 = scmp.eq.s32.totalorder %s27, 0
      %p138 = por %p136, %p137
      %s140 = sadd.s32 %s139, 1
      %p143 = scmp.eq.s32.totalorder %s21, 1
      %p144 = scmp.ne.s32.totalorder %s139, %s141
      %p145 = scmp.eq.s32.totalorder %s21, 0
      %p146 = por %p144, %p145
      %p147 = scmp.ne.s32.totalorder %s139, %s141
      %p148 = scmp.eq.s32.totalorder %s26, 1
      %p149 = por %p147, %p148
      %p150 = scmp.ne.s32.totalorder %s141, %s142
      %p151 = scmp.eq.s32.totalorder %s26, 0
      %p152 = por %p150, %p151
      %p153 = scmp.ne.s32.totalorder %s141, %s142
      %p154 = scmp.eq.s32.totalorder %s27, 1
      %p155 = por %p153, %p154
      %p157 = scmp.ne.s32.totalorder %s142, %s156
      %p158 = scmp.eq.s32.totalorder %s27, 0
      %p159 = por %p157, %p158
      %s161 = sadd.s32 %s160, 1
      %p164 = scmp.eq.s32.totalorder %s21, 1
      %p165 = scmp.ne.s32.totalorder %s160, %s162
      %p166 = scmp.eq.s32.totalorder %s21, 0
      %p167 = por %p165, %p166
      %p168 = scmp.ne.s32.totalorder %s160, %s162
      %p169 = scmp.eq.s32.totalorder %s26, 1
      %p170 = por %p168, %p169
      %p171 = scmp.ne.s32.totalorder %s162, %s163
      %p172 = scmp.eq.s32.totalorder %s26, 0
      %p173 = por %p171, %p172
      %p174 = scmp.ne.s32.totalorder %s162, %s163
      %p175 = scmp.eq.s32.totalorder %s27, 1
      %p176 = por %p174, %p175
      %p178 = scmp.ne.s32.totalorder %s163, %s177
      %p179 = scmp.eq.s32.totalorder %s27, 0
      %p180 = por %p178, %p179
      %s181 = ssub.s32 %s21, %s28
      %p182 = scmp.eq.s32.totalorder %s181, 0
      %s184 = sadd.s32 %s183, 1
      %s185 = scalar_select %p182, %s183, %s184
      %p188 = pneg %p182
      %p189 = scmp.eq.s32.totalorder %s21, 1
      %p190 = por %p188, %p189
      %p191 = scmp.ne.s32.totalorder %s183, %s186
      %p192 = scmp.eq.s32.totalorder %s21, 0
      %p193 = por %p191, %p192
      %p194 = scmp.ne.s32.totalorder %s183, %s186
      %p195 = scmp.eq.s32.totalorder %s26, 1
      %p196 = por %p194, %p195
      %p197 = scmp.ne.s32.totalorder %s186, %s187
      %p198 = scmp.eq.s32.totalorder %s26, 0
      %p199 = por %p197, %p198
      %p200 = scmp.ne.s32.totalorder %s186, %s187
      %p201 = scmp.eq.s32.totalorder %s27, 1
      %p202 = por %p200, %p201
      %p204 = scmp.ne.s32.totalorder %s187, %s203
      %p205 = scmp.eq.s32.totalorder %s27, 0
      %p206 = por %p204, %p205
      %p207 = scmp.le.s32.totalorder 1, %s21
      %p208 = scmp.lt.s32.totalorder %s21, 3
      %p209 = pnand %p207, %p208
      %p210 = pneg %p209
      // Predicated region
      $region9: #{tpu_custom_call.1} parent=5 // pred_check
        _
      $region10: #{tpu_custom_call.1} parent=5 // pred_check_branch
        %212 = sbr.rel (%p209) target = $region12
      $region11: #{tpu_custom_call.1} parent=5 // pred_region
        %s213 = ssub.s32 %s21, 1
        // Predicated region
        $region13: #{tpu_custom_call.1} parent=11 // pred_check
          %p214 = pneg %p68
        $region14: #{tpu_custom_call.1} parent=11 // pred_check_branch
          %216 = sbr.rel (%p214) target = $region16
        $region15: #{tpu_custom_call.1} parent=11 // pred_region
          %s218 = ssub.s32 1024, 1024
          %219 = vsyncadd [#allocation7], %s218
          %s220 = sshll.u32 [#allocation6], 4
          %s221 = int_to_ptr.vmem [resolvable:$true] %s220
          %226 = dma.hbm_to_vmem [thread:$0]  %s1, 1024, %s221, [#allocation7], 64, 64, 4
        $region16: #{tpu_custom_call.1} parent=11 // pred_fallthru
          _
        // Predicated region
        $region17: #{tpu_custom_call.1} parent=11 // pred_check
          %p227 = pneg %p89
        $region18: #{tpu_custom_call.1} parent=11 // pred_check_branch
          %229 = sbr.rel (%p227) target = $region20
        $region19: #{tpu_custom_call.1} parent=11 // pred_region
          _
        $region20: #{tpu_custom_call.1} parent=11 // pred_fallthru
          _
        // Predicated region
        $region21: #{tpu_custom_call.1} parent=11 // pred_check
          %p230 = pneg %p110
        $region22: #{tpu_custom_call.1} parent=11 // pred_check_branch
          %232 = sbr.rel (%p230) target = $region24
        $region23: #{tpu_custom_call.1} parent=11 // pred_region
          %s234 = ssub.s32 9216, 9216
          %235 = vsyncadd [#allocation7], %s234
          %s236 = sshll.u32 [#allocation8], 4
          %s237 = int_to_ptr.vmem [resolvable:$true] %s236
          %242 = dma.hbm_to_vmem [thread:$0]  %s3, 9216, %s237, [#allocation7], 64, 64, 4
        $region24: #{tpu_custom_call.1} parent=11 // pred_fallthru
          _
        // Predicated region
        $region25: #{tpu_custom_call.1} parent=11 // pred_check
          %p243 = pneg %p131
        $region26: #{tpu_custom_call.1} parent=11 // pred_check_branch
          %245 = sbr.rel (%p243) target = $region28
        $region27: #{tpu_custom_call.1} parent=11 // pred_region
          _
        $region28: #{tpu_custom_call.1} parent=11 // pred_fallthru
          _
        // Predicated region
        $region29: #{tpu_custom_call.1} parent=11 // pred_check
          %p246 = pneg %p152
        $region30: #{tpu_custom_call.1} parent=11 // pred_check_branch
          %248 = sbr.rel (%p246) target = $region32
        $region31: #{tpu_custom_call.1} parent=11 // pred_region
          %s250 = ssub.s32 1024, 1024
          %251 = vsyncadd [#allocation10], %s250
          %s252 = sshll.u32 [#allocation9], 4
          %s253 = int_to_ptr.vmem [resolvable:$true] %s252
          %258 = dma.hbm_to_vmem [thread:$0]  %s5, 1024, %s253, [#allocation10], 64, 64, 4
        $region32: #{tpu_custom_call.1} parent=11 // pred_fallthru
          _
        // Predicated region
        $region33: #{tpu_custom_call.1} parent=11 // pred_check
          %p259 = pneg %p173
        $region34: #{tpu_custom_call.1} parent=11 // pred_check_branch
          %261 = sbr.rel (%p259) target = $region36
        $region35: #{tpu_custom_call.1} parent=11 // pred_region
          _
        $region36: #{tpu_custom_call.1} parent=11 // pred_fallthru
          _
      $region12: #{tpu_custom_call.1} parent=5 // pred_fallthru
        _
      %p262 = scmp.lt.s32.totalorder %s21, 2
      // Predicated region
      $region37: #{tpu_custom_call.1} parent=5 // pred_check
        %p263 = pneg %p262
      $region38: #{tpu_custom_call.1} parent=5 // pred_check_branch
        %265 = sbr.rel (%p263) target = $region40
      $region39: #{tpu_custom_call.1} parent=5 // pred_region
        // Predicated region
        $region41: #{tpu_custom_call.1} parent=39 // pred_check
          %p266 = pneg %p41
        $region42: #{tpu_custom_call.1} parent=39 // pred_check_branch
          %268 = sbr.rel (%p266) target = $region44
        $region43: #{tpu_custom_call.1} parent=39 // pred_region
          %s269 = sand.u32 %s31, 1
          %s270 = scalar_lea.sflag [#allocation4], %s269
          %s271 = sand.u32 %s31, 1
          %s272 = smul.addr %s271, 64
          %s273 = scalar_lea.vmem [#allocation3], %s272
          %s275 = ssub.s32 1024, 1024
          %276 = vsyncadd %s270, %s275
          %s277 = smul.addr %s21, 8
          %s278 = smul.addr %s277, 128
          %s279 = scalar_lea.hbm %s0, %s278
          %s280 = sshll.u32 %s273, 4
          %s281 = int_to_ptr.vmem [resolvable:$true] %s280
          %286 = dma.hbm_to_vmem [thread:$0]  %s279, 1024, %s281, %s270, 128, 128, 8
        $region44: #{tpu_custom_call.1} parent=39 // pred_fallthru
          _
      $region40: #{tpu_custom_call.1} parent=5 // pred_fallthru
        _
      %p287 = scmp.le.s32.totalorder 1, %s21
      %p288 = scmp.lt.s32.totalorder %s21, 3
      %p289 = pnand %p287, %p288
      %p290 = pneg %p289
      // Predicated region
      $region45: #{tpu_custom_call.1} parent=5 // pred_check
        _
      $region46: #{tpu_custom_call.1} parent=5 // pred_check_branch
        %292 = sbr.rel (%p289) target = $region48
      $region47: #{tpu_custom_call.1} parent=5 // pred_region
        %s293 = ssub.s32 %s21, 1
        %s294 = sand.u32 %s34, 1
        %s295 = scalar_lea.sflag [#allocation4], %s294
        %s296 = sand.u32 %s34, 1
        %s297 = smul.addr %s296, 64
        %s298 = scalar_lea.vmem [#allocation3], %s297
        // Predicated region
        $region49: #{tpu_custom_call.1} parent=47 // pred_check
          %p299 = pneg %p47
        $region50: #{tpu_custom_call.1} parent=47 // pred_check_branch
          %301 = sbr.rel (%p299) target = $region52
        $region51: #{tpu_custom_call.1} parent=47 // pred_region
          %302 = dma.done %s295, 1024
        $region52: #{tpu_custom_call.1} parent=47 // pred_fallthru
          _
        // Predicated region
        $region53: #{tpu_custom_call.1} parent=47 // pred_check
          %p303 = pneg %p68
        $region54: #{tpu_custom_call.1} parent=47 // pred_check_branch
          %305 = sbr.rel (%p303) target = $region56
        $region55: #{tpu_custom_call.1} parent=47 // pred_region
          %306 = dma.done [#allocation7], 1024
        $region56: #{tpu_custom_call.1} parent=47 // pred_fallthru
          _
        // Predicated region
        $region57: #{tpu_custom_call.1} parent=47 // pred_check
          %p307 = pneg %p110
        $region58: #{tpu_custom_call.1} parent=47 // pred_check_branch
          %309 = sbr.rel (%p307) target = $region60
        $region59: #{tpu_custom_call.1} parent=47 // pred_region
          %310 = dma.done [#allocation7], 9216
        $region60: #{tpu_custom_call.1} parent=47 // pred_fallthru
          _
        // Predicated region
        $region61: #{tpu_custom_call.1} parent=47 // pred_check
          %p311 = pneg %p152
        $region62: #{tpu_custom_call.1} parent=47 // pred_check_branch
          %313 = sbr.rel (%p311) target = $region64
        $region63: #{tpu_custom_call.1} parent=47 // pred_region
          %314 = dma.done [#allocation10], 1024
        $region64: #{tpu_custom_call.1} parent=47 // pred_fallthru
          _
        %s315 = sand.u32 %s34, 1
        %s316 = scalar_lea.sflag [#allocation4], %s315
        %s317 = sand.u32 %s34, 1
        %s318 = smul.addr %s317, 64
        %s319 = scalar_lea.vmem [#allocation3], %s318
        %p320 = pneg %p47
        %p321 = pneg %p44
        %p322 = pneg %p68
        %p323 = pneg %p65
        %p324 = pneg %p89
        %p325 = pneg %p86
        %p326 = pneg %p110
        %p327 = pneg %p107
        %p328 = pneg %p131
        %p329 = pneg %p128
        %p330 = pneg %p152
        %p331 = pneg %p149
        %p332 = pneg %p173
        %p333 = pneg %p170
        %p334 = pneg %p199
        %p335 = pneg %p196
        %s336 = sand.u32 %s186, 1
        %s337 = scalar_lea.sflag [#allocation5], %s336
        %s338 = sand.u32 %s186, 1
        %s339 = smul.addr %s338, 64
        %s340 = scalar_lea.vmem [#allocation11], %s339
        %v342 = vld [vmem:[%s298] sm:$0xff]
        %v343 = vld [vmem:[%s298 + $0x8] sm:$0xff]
        %v344 = vld [vmem:[%s298 + $0x10] sm:$0xff]
        %v345 = vld [vmem:[%s298 + $0x18] sm:$0xff]
        %v346 = vld [vmem:[%s298 + $0x20] sm:$0xff]
        %v347 = vld [vmem:[%s298 + $0x28] sm:$0xff]
        %v348 = vld [vmem:[%s298 + $0x30] sm:$0xff]
        %v349 = vld [vmem:[%s298 + $0x38] sm:$0xff]
        %v350 = vpack.c.bf16 %v343, %v342
        %v351 = vpack.c.bf16 %v345, %v344
        %v352 = vpack.c.bf16 %v347, %v346
        %v353 = vpack.c.bf16 %v349, %v348
        %v354 = vld [vmem:[#allocation6] sm:$0xf]
        %v355 = vld [vmem:[#allocation6 + $0x4] sm:$0xf]
        %v356 = vld [vmem:[#allocation6 + $0x8] sm:$0xf]
        %v357 = vld [vmem:[#allocation6 + $0xc] sm:$0xf]
        %v358 = vld [vmem:[#allocation6 + $0x10] sm:$0xf]
        %v359 = vld [vmem:[#allocation6 + $0x14] sm:$0xf]
        %v360 = vld [vmem:[#allocation6 + $0x18] sm:$0xf]
        %v361 = vld [vmem:[#allocation6 + $0x1c] sm:$0xf]
        %v362 = vld [vmem:[#allocation6 + $0x20] sm:$0xf]
        %v363 = vld [vmem:[#allocation6 + $0x24] sm:$0xf]
        %v364 = vld [vmem:[#allocation6 + $0x28] sm:$0xf]
        %v365 = vld [vmem:[#allocation6 + $0x2c] sm:$0xf]
        %v366 = vld [vmem:[#allocation6 + $0x30] sm:$0xf]
        %v367 = vld [vmem:[#allocation6 + $0x34] sm:$0xf]
        %v368 = vld [vmem:[#allocation6 + $0x38] sm:$0xf]
        %v369 = vld [vmem:[#allocation6 + $0x3c] sm:$0xf]
        %v370 = vld [vmem:[%s2] sm:$0x1]
        %v372 = vlaneseq
        %v373 = vshrl.u32 %v372, 7
        %v374 = vsub.s32 0, %v373
        %v375 = vrot.slane %v370, %v374
        %v393 = vunpack.c.l.b16 %v354
        %v394 = vunpack.c.l.b16 %v355
        %v395 = vunpack.c.l.b16 %v356
        %v396 = vunpack.c.l.b16 %v357
        %v397 = vunpack.c.l.b16 %v358
        %v398 = vunpack.c.l.b16 %v359
        %v399 = vunpack.c.l.b16 %v360
        %v400 = vunpack.c.l.b16 %v361
        %v401 = vunpack.c.l.b16 %v362
        %v402 = vunpack.c.l.b16 %v363
        %v403 = vunpack.c.l.b16 %v364
        %v404 = vunpack.c.l.b16 %v365
        %v405 = vunpack.c.l.b16 %v366
        %v406 = vunpack.c.l.b16 %v367
        %v407 = vunpack.c.l.b16 %v368
        %v408 = vunpack.c.l.b16 %v369
        %v409 = vpack.c.b16 %v394, %v393
        %v410 = vpack.c.b16 %v396, %v395
        %v411 = vpack.c.b16 %v398, %v397
        %v412 = vpack.c.b16 %v400, %v399
        %v413 = vpack.c.b16 %v402, %v401
        %v414 = vpack.c.b16 %v404, %v403
        %v415 = vpack.c.b16 %v406, %v405
        %v416 = vpack.c.b16 %v408, %v407
        %425 = vmatprep.subr.bf16.mxu0 0
        %426 = vmatpush1.bf16.msra.mxu0 %v409
        %427 = vmatprep.subr.bf16.mxu0 0
        %428 = vmatpush1.bf16.msra.mxu0 %v410
        %429 = vmatprep.subr.bf16.mxu0 0
        %430 = vmatpush1.bf16.msra.mxu0 %v411
        %431 = vmatprep.subr.bf16.mxu0 0
        %432 = vmatpush1.bf16.msra.mxu0 %v412
        %433 = vmatprep.subr.bf16.mxu0 0
        %434 = vmatpush1.bf16.msra.mxu0 %v413
        %435 = vmatprep.subr.bf16.mxu0 0
        %436 = vmatpush1.bf16.msra.mxu0 %v414
        %437 = vmatprep.subr.bf16.mxu0 0
        %438 = vmatpush1.bf16.msra.mxu0 %v415
        %439 = vmatprep.subr.bf16.mxu0 0
        %440 = vmatpush1.bf16.msra.mxu0 %v416
        %441 = vmatprep.subr.bf16.mxu0 0
        %442 = vmatpush1.bf16.msra.mxu0 0
        %443 = vmatprep.subr.bf16.mxu0 0
        %444 = vmatpush1.bf16.msra.mxu0 0
        %445 = vmatprep.subr.bf16.mxu0 0
        %446 = vmatpush1.bf16.msra.mxu0 0
        %447 = vmatprep.subr.bf16.mxu0 0
        %448 = vmatpush1.bf16.msra.mxu0 0
        %449 = vmatprep.subr.bf16.mxu0 0
        %450 = vmatpush1.bf16.msra.mxu0 0
        %451 = vmatprep.subr.bf16.mxu0 0
        %452 = vmatpush1.bf16.msra.mxu0 0
        %453 = vmatprep.subr.bf16.mxu0 0
        %454 = vmatpush1.bf16.msra.mxu0 0
        %455 = vmatprep.subr.bf16.mxu0 0
        %456 = vmatpush1.bf16.msra.mxu0 0
        %457 = vmatprep.mubr.bf16.mxu0 0
        %458 = vmatmul.mubr.bf16.gmra.mrb[0].mxu0 %v350
        %v459 = vpop.f32.mrb[0].mxu0
        %v460 = vadd.f32 %v375, %v459
        %v461 = vpop.f32.mrb[0].mxu0
        %v462 = vpop.f32.mrb[0].mxu0
        %v463 = vadd.f32 %v375, %v462
        %v464 = vpop.f32.mrb[0].mxu0
        %465 = vmatprep.mubr.bf16.mxu0 0
        %466 = vmatmul.mubr.bf16.gmra.mrb[0].mxu0 %v351
        %v467 = vpop.f32.mrb[0].mxu0
        %v468 = vadd.f32 %v375, %v467
        %v469 = vpop.f32.mrb[0].mxu0
        %v470 = vpop.f32.mrb[0].mxu0
        %v471 = vadd.f32 %v375, %v470
        %v472 = vpop.f32.mrb[0].mxu0
        %473 = vmatprep.mubr.bf16.mxu0 0
        %474 = vmatmul.mubr.bf16.gmra.mrb[0].mxu0 %v352
        %v475 = vpop.f32.mrb[0].mxu0
        %v476 = vadd.f32 %v375, %v475
        %v477 = vpop.f32.mrb[0].mxu0
        %v478 = vpop.f32.mrb[0].mxu0
        %v479 = vadd.f32 %v375, %v478
        %v480 = vpop.f32.mrb[0].mxu0
        %481 = vmatprep.mubr.bf16.mxu0 0
        %482 = vmatmul.mubr.bf16.gmra.mrb[0].mxu0 %v353
        %v483 = vpop.f32.mrb[0].mxu0
        %v484 = vadd.f32 %v375, %v483
        %v485 = vpop.f32.mrb[0].mxu0
        %v486 = vpop.f32.mrb[0].mxu0
        %v487 = vadd.f32 %v375, %v486
        %v488 = vpop.f32.mrb[0].mxu0
        %489 = vdwg.mxu0
        %v490 = vmax.f32 %v460, 0.0
        %v491 = vmax.f32 %v463, 0.0
        %v492 = vmax.f32 %v468, 0.0
        %v493 = vmax.f32 %v471, 0.0
        %v494 = vmax.f32 %v476, 0.0
        %v495 = vmax.f32 %v479, 0.0
        %v496 = vmax.f32 %v484, 0.0
        %v497 = vmax.f32 %v487, 0.0
        %v506 = vrot.slane %v490, 7
        %v507 = vrot.slane %v491, 7
        %v508 = vrot.slane %v492, 7
        %v509 = vrot.slane %v493, 7
        %v510 = vrot.slane %v494, 7
        %v511 = vrot.slane %v495, 7
        %v512 = vrot.slane %v496, 7
        %v513 = vrot.slane %v497, 7
        %vm522 = vcmask 1040384
        %v523 = vsel %vm522, 0.0, %v506
        %v524 = vsel %vm522, 0.0, %v507
        %v525 = vsel %vm522, 0.0, %v508
        %v526 = vsel %vm522, 0.0, %v509
        %v527 = vsel %vm522, 0.0, %v510
        %v528 = vsel %vm522, 0.0, %v511
        %v529 = vsel %vm522, 0.0, %v512
        %v530 = vsel %vm522, 0.0, %v513
        %v531 = vsel %vm522, %v506, 0.0
        %v532 = vsel %vm522, %v507, 0.0
        %v533 = vsel %vm522, %v508, 0.0
        %v534 = vsel %vm522, %v509, 0.0
        %v535 = vsel %vm522, %v510, 0.0
        %v536 = vsel %vm522, %v511, 0.0
        %v537 = vsel %vm522, %v512, 0.0
        %v538 = vsel %vm522, %v513, 0.0
        %539 = vst [vmem:[#allocation2] sm:$0xf] 0
        %540 = vst [vmem:[#allocation2 + $0x8] sm:$0xf] 0
        %541 = vst [vmem:[#allocation2 + $0x10] sm:$0xf] 0
        %v542 = vpack.c.bf16 %v523, %v523
        %543 = vst [vmem:[#allocation2 + $0x18] sm:$0xf] %v542
        %v544 = vpack.c.bf16 %v531, %v523
        %v546 = vshrl.u32 %v544, 16
        %v548 = vshll.u32 %v544, 16
        %v550 = vrot.slane %v548, 1
        %v551 = vor.u32 %v546, %v550
        %553 = vst [vmem:[#allocation2 + $0x20] sm:$0xf] %v551
        %v555 = vrot.slane %v544, 1
        %557 = vst [vmem:[#allocation2 + $0x28] sm:$0xf] %v555
        %v558 = vpack.c.bf16 %v524, %v524
        %559 = vst [vmem:[#allocation2 + $0x30] sm:$0xf] %v558
        %v560 = vpack.c.bf16 %v532, %v524
        %v562 = vshrl.u32 %v560, 16
        %v564 = vshll.u32 %v560, 16
        %v566 = vrot.slane %v564, 1
        %v567 = vor.u32 %v562, %v566
        %569 = vst [vmem:[#allocation2 + $0x38] sm:$0xf] %v567
        %v571 = vrot.slane %v560, 1
        %573 = vst [vmem:[#allocation2 + $0x40] sm:$0xf] %v571
        %v575 = vrot.slane %v542, 4
        %577 = vst [vmem:[#allocation2] sm:$0xf0] %v575
        %v578 = vrot.slane %v546, 4
        %v579 = vrot.slane %v548, 5
        %v580 = vor.u32 %v578, %v579
        %582 = vst [vmem:[#allocation2 + $0x8] sm:$0xf0] %v580
        %v583 = vrot.slane %v544, 5
        %585 = vst [vmem:[#allocation2 + $0x10] sm:$0xf0] %v583
        %v587 = vrot.slane %v558, 4
        %589 = vst [vmem:[#allocation2 + $0x18] sm:$0xf0] %v587
        %v590 = vrot.slane %v562, 4
        %v591 = vrot.slane %v564, 5
        %v592 = vor.u32 %v590, %v591
        %594 = vst [vmem:[#allocation2 + $0x20] sm:$0xf0] %v592
        %v595 = vrot.slane %v560, 5
        %597 = vst [vmem:[#allocation2 + $0x28] sm:$0xf0] %v595
        %v598 = vpack.c.bf16 %v525, %v525
        %v600 = vrot.slane %v598, 4
        %602 = vst [vmem:[#allocation2 + $0x30] sm:$0xf0] %v600
        %v603 = vpack.c.bf16 %v533, %v525
        %v605 = vshrl.u32 %v603, 16
        %v607 = vrot.slane %v605, 4
        %v608 = vshll.u32 %v603, 16
        %v610 = vrot.slane %v608, 5
        %v611 = vor.u32 %v607, %v610
        %613 = vst [vmem:[#allocation2 + $0x38] sm:$0xf0] %v611
        %v615 = vrot.slane %v603, 5
        %617 = vst [vmem:[#allocation2 + $0x40] sm:$0xf0] %v615
        %618 = vst [vmem:[#allocation2 + $0x48] sm:$0xf] %v558
        %619 = vst [vmem:[#allocation2 + $0x50] sm:$0xf] %v567
        %620 = vst [vmem:[#allocation2 + $0x58] sm:$0xf] %v571
        %621 = vst [vmem:[#allocation2 + $0x60] sm:$0xf] %v598
        %v622 = vrot.slane %v608, 1
        %v623 = vor.u32 %v605, %v622
        %625 = vst [vmem:[#allocation2 + $0x68] sm:$0xf] %v623
        %v626 = vrot.slane %v603, 1
        %628 = vst [vmem:[#allocation2 + $0x70] sm:$0xf] %v626
        %v629 = vpack.c.bf16 %v526, %v526
        %630 = vst [vmem:[#allocation2 + $0x78] sm:$0xf] %v629
        %v631 = vpack.c.bf16 %v534, %v526
        %v633 = vshrl.u32 %v631, 16
        %v635 = vshll.u32 %v631, 16
        %v637 = vrot.slane %v635, 1
        %v638 = vor.u32 %v633, %v637
        %640 = vst [vmem:[#allocation2 + $0x80] sm:$0xf] %v638
        %v642 = vrot.slane %v631, 1
        %644 = vst [vmem:[#allocation2 + $0x88] sm:$0xf] %v642
        %645 = vst [vmem:[#allocation2 + $0x48] sm:$0xf0] %v600
        %646 = vst [vmem:[#allocation2 + $0x50] sm:$0xf0] %v611
        %647 = vst [vmem:[#allocation2 + $0x58] sm:$0xf0] %v615
        %v649 = vrot.slane %v629, 4
        %651 = vst [vmem:[#allocation2 + $0x60] sm:$0xf0] %v649
        %v652 = vrot.slane %v633, 4
        %v653 = vrot.slane %v635, 5
        %v654 = vor.u32 %v652, %v653
        %656 = vst [vmem:[#allocation2 + $0x68] sm:$0xf0] %v654
        %v657 = vrot.slane %v631, 5
        %659 = vst [vmem:[#allocation2 + $0x70] sm:$0xf0] %v657
        %v660 = vpack.c.bf16 %v527, %v527
        %v662 = vrot.slane %v660, 4
        %664 = vst [vmem:[#allocation2 + $0x78] sm:$0xf0] %v662
        %v665 = vpack.c.bf16 %v535, %v527
        %v667 = vshrl.u32 %v665, 16
        %v669 = vrot.slane %v667, 4
        %v670 = vshll.u32 %v665, 16
        %v672 = vrot.slane %v670, 5
        %v673 = vor.u32 %v669, %v672
        %675 = vst [vmem:[#allocation2 + $0x80] sm:$0xf0] %v673
        %v677 = vrot.slane %v665, 5
        %679 = vst [vmem:[#allocation2 + $0x88] sm:$0xf0] %v677
        %680 = vst [vmem:[#allocation2 + $0x90] sm:$0xf] %v629
        %681 = vst [vmem:[#allocation2 + $0x98] sm:$0xf] %v638
        %682 = vst [vmem:[#allocation2 + $0xa0] sm:$0xf] %v642
        %683 = vst [vmem:[#allocation2 + $0xa8] sm:$0xf] %v660
        %v684 = vrot.slane %v670, 1
        %v685 = vor.u32 %v667, %v684
        %687 = vst [vmem:[#allocation2 + $0xb0] sm:$0xf] %v685
        %v688 = vrot.slane %v665, 1
        %690 = vst [vmem:[#allocation2 + $0xb8] sm:$0xf] %v688
        %v691 = vpack.c.bf16 %v528, %v528
        %692 = vst [vmem:[#allocation2 + $0xc0] sm:$0xf] %v691
        %v693 = vpack.c.bf16 %v536, %v528
        %v695 = vshrl.u32 %v693, 16
        %v697 = vshll.u32 %v693, 16
        %v699 = vrot.slane %v697, 1
        %v700 = vor.u32 %v695, %v699
        %702 = vst [vmem:[#allocation2 + $0xc8] sm:$0xf] %v700
        %v704 = vrot.slane %v693, 1
        %706 = vst [vmem:[#allocation2 + $0xd0] sm:$0xf] %v704
        %707 = vst [vmem:[#allocation2 + $0x90] sm:$0xf0] %v662
        %708 = vst [vmem:[#allocation2 + $0x98] sm:$0xf0] %v673
        %709 = vst [vmem:[#allocation2 + $0xa0] sm:$0xf0] %v677
        %v711 = vrot.slane %v691, 4
        %713 = vst [vmem:[#allocation2 + $0xa8] sm:$0xf0] %v711
        %v714 = vrot.slane %v695, 4
        %v715 = vrot.slane %v697, 5
        %v716 = vor.u32 %v714, %v715
        %718 = vst [vmem:[#allocation2 + $0xb0] sm:$0xf0] %v716
        %v719 = vrot.slane %v693, 5
        %721 = vst [vmem:[#allocation2 + $0xb8] sm:$0xf0] %v719
        %v722 = vpack.c.bf16 %v529, %v529
        %v724 = vrot.slane %v722, 4
        %726 = vst [vmem:[#allocation2 + $0xc0] sm:$0xf0] %v724
        %v727 = vpack.c.bf16 %v537, %v529
        %v729 = vshrl.u32 %v727, 16
        %v731 = vrot.slane %v729, 4
        %v732 = vshll.u32 %v727, 16
        %v734 = vrot.slane %v732, 5
        %v735 = vor.u32 %v731, %v734
        %737 = vst [vmem:[#allocation2 + $0xc8] sm:$0xf0] %v735
        %v739 = vrot.slane %v727, 5
        %741 = vst [vmem:[#allocation2 + $0xd0] sm:$0xf0] %v739
        %742 = vst [vmem:[#allocation2 + $0xd8] sm:$0xf] %v691
        %743 = vst [vmem:[#allocation2 + $0xe0] sm:$0xf] %v700
        %744 = vst [vmem:[#allocation2 + $0xe8] sm:$0xf] %v704
        %745 = vst [vmem:[#allocation2 + $0xf0] sm:$0xf] %v722
        %v746 = vrot.slane %v732, 1
        %v747 = vor.u32 %v729, %v746
        %749 = vst [vmem:[#allocation2 + $0xf8] sm:$0xf] %v747
        %v750 = vrot.slane %v727, 1
        %752 = vst [vmem:[#allocation2 + $0x100] sm:$0xf] %v750
        %v753 = vpack.c.bf16 %v530, %v530
        %754 = vst [vmem:[#allocation2 + $0x108] sm:$0xf] %v753
        %v755 = vpack.c.bf16 %v538, %v530
        %v757 = vshrl.u32 %v755, 16
        %v759 = vshll.u32 %v755, 16
        %v761 = vrot.slane %v759, 1
        %v762 = vor.u32 %v757, %v761
        %764 = vst [vmem:[#allocation2 + $0x110] sm:$0xf] %v762
        %v766 = vrot.slane %v755, 1
        %768 = vst [vmem:[#allocation2 + $0x118] sm:$0xf] %v766
        %769 = vst [vmem:[#allocation2 + $0xd8] sm:$0xf0] %v724
        %770 = vst [vmem:[#allocation2 + $0xe0] sm:$0xf0] %v735
        %771 = vst [vmem:[#allocation2 + $0xe8] sm:$0xf0] %v739
        %v773 = vrot.slane %v753, 4
        %775 = vst [vmem:[#allocation2 + $0xf0] sm:$0xf0] %v773
        %v776 = vrot.slane %v757, 4
        %v777 = vrot.slane %v759, 5
        %v778 = vor.u32 %v776, %v777
        %780 = vst [vmem:[#allocation2 + $0xf8] sm:$0xf0] %v778
        %v781 = vrot.slane %v755, 5
        %783 = vst [vmem:[#allocation2 + $0x100] sm:$0xf0] %v781
        %784 = vst [vmem:[#allocation2 + $0x108] sm:$0xf0] 0
        %785 = vst [vmem:[#allocation2 + $0x110] sm:$0xf0] 0
        %786 = vst [vmem:[#allocation2 + $0x118] sm:$0xf0] 0
        %v787 = vld [vmem:[#allocation2] sm:$0xff]
        %v788 = vld [vmem:[#allocation2 + $0x8] sm:$0xff]
        %v789 = vld [vmem:[#allocation2 + $0x10] sm:$0xff]
        %v790 = vld [vmem:[#allocation2 + $0x18] sm:$0xff]
        %v791 = vld [vmem:[#allocation2 + $0x20] sm:$0xff]
        %v792 = vld [vmem:[#allocation2 + $0x28] sm:$0xff]
        %v793 = vld [vmem:[#allocation2 + $0x30] sm:$0xff]
        %v794 = vld [vmem:[#allocation2 + $0x38] sm:$0xff]
        %v795 = vld [vmem:[#allocation2 + $0x40] sm:$0xff]
        %v796 = vld [vmem:[#allocation2 + $0x48] sm:$0xff]
        %v797 = vld [vmem:[#allocation2 + $0x50] sm:$0xff]
        %v798 = vld [vmem:[#allocation2 + $0x58] sm:$0xff]
        %v799 = vld [vmem:[#allocation2 + $0x60] sm:$0xff]
        %v800 = vld [vmem:[#allocation2 + $0x68] sm:$0xff]
        %v801 = vld [vmem:[#allocation2 + $0x70] sm:$0xff]
        %v802 = vld [vmem:[#allocation2 + $0x78] sm:$0xff]
        %v803 = vld [vmem:[#allocation2 + $0x80] sm:$0xff]
        %v804 = vld [vmem:[#allocation2 + $0x88] sm:$0xff]
        %v805 = vld [vmem:[#allocation2 + $0x90] sm:$0xff]
        %v806 = vld [vmem:[#allocation2 + $0x98] sm:$0xff]
        %v807 = vld [vmem:[#allocation2 + $0xa0] sm:$0xff]
        %v808 = vld [vmem:[#allocation2 + $0xa8] sm:$0xff]
        %v809 = vld [vmem:[#allocation2 + $0xb0] sm:$0xff]
        %v810 = vld [vmem:[#allocation2 + $0xb8] sm:$0xff]
        %v811 = vld [vmem:[#allocation2 + $0xc0] sm:$0xff]
        %v812 = vld [vmem:[#allocation2 + $0xc8] sm:$0xff]
        %v813 = vld [vmem:[#allocation2 + $0xd0] sm:$0xff]
        %v814 = vld [vmem:[#allocation2 + $0xd8] sm:$0xff]
        %v815 = vld [vmem:[#allocation2 + $0xe0] sm:$0xff]
        %v816 = vld [vmem:[#allocation2 + $0xe8] sm:$0xff]
        %v817 = vld [vmem:[#allocation2 + $0xf0] sm:$0xff]
        %v818 = vld [vmem:[#allocation2 + $0xf8] sm:$0xff]
        %v819 = vld [vmem:[#allocation2 + $0x100] sm:$0xff]
        %v820 = vld [vmem:[#allocation2 + $0x108] sm:$0xff]
        %v821 = vld [vmem:[#allocation2 + $0x110] sm:$0xff]
        %v822 = vld [vmem:[#allocation2 + $0x118] sm:$0xff]
        %v823 = vld [vmem:[#allocation8] sm:$0xf]
        %v824 = vld [vmem:[#allocation8 + $0x4] sm:$0xf]
        %v825 = vld [vmem:[#allocation8 + $0x8] sm:$0xf]
        %v826 = vld [vmem:[#allocation8 + $0xc] sm:$0xf]
        %v827 = vld [vmem:[#allocation8 + $0x10] sm:$0xf]
        %v828 = vld [vmem:[#allocation8 + $0x14] sm:$0xf]
        %v829 = vld [vmem:[#allocation8 + $0x18] sm:$0xf]
        %v830 = vld [vmem:[#allocation8 + $0x1c] sm:$0xf]
        %v831 = vld [vmem:[#allocation8 + $0x20] sm:$0xf]
        %v832 = vld [vmem:[#allocation8 + $0x24] sm:$0xf]
        %v833 = vld [vmem:[#allocation8 + $0x28] sm:$0xf]
        %v834 = vld [vmem:[#allocation8 + $0x2c] sm:$0xf]
        %v835 = vld [vmem:[#allocation8 + $0x30] sm:$0xf]
        %v836 = vld [vmem:[#allocation8 + $0x34] sm:$0xf]
        %v837 = vld [vmem:[#allocation8 + $0x38] sm:$0xf]
        %v838 = vld [vmem:[#allocation8 + $0x3c] sm:$0xf]
        %v839 = vld [vmem:[#allocation8 + $0x40] sm:$0xf]
        %v840 = vld [vmem:[#allocation8 + $0x44] sm:$0xf]
        %v841 = vld [vmem:[#allocation8 + $0x48] sm:$0xf]
        %v842 = vld [vmem:[#allocation8 + $0x4c] sm:$0xf]
        %v843 = vld [vmem:[#allocation8 + $0x50] sm:$0xf]
        %v844 = vld [vmem:[#allocation8 + $0x54] sm:$0xf]
        %v845 = vld [vmem:[#allocation8 + $0x58] sm:$0xf]
        %v846 = vld [vmem:[#allocation8 + $0x5c] sm:$0xf]
        %v847 = vld [vmem:[#allocation8 + $0x60] sm:$0xf]
        %v848 = vld [vmem:[#allocation8 + $0x64] sm:$0xf]
        %v849 = vld [vmem:[#allocation8 + $0x68] sm:$0xf]
        %v850 = vld [vmem:[#allocation8 + $0x6c] sm:$0xf]
        %v851 = vld [vmem:[#allocation8 + $0x70] sm:$0xf]
        %v852 = vld [vmem:[#allocation8 + $0x74] sm:$0xf]
        %v853 = vld [vmem:[#allocation8 + $0x78] sm:$0xf]
        %v854 = vld [vmem:[#allocation8 + $0x7c] sm:$0xf]
        %v855 = vld [vmem:[#allocation8 + $0x80] sm:$0xf]
        %v856 = vld [vmem:[#allocation8 + $0x84] sm:$0xf]
        %v857 = vld [vmem:[#allocation8 + $0x88] sm:$0xf]
        %v858 = vld [vmem:[#allocation8 + $0x8c] sm:$0xf]
        %v859 = vld [vmem:[#allocation8 + $0x90] sm:$0xf]
        %v860 = vld [vmem:[#allocation8 + $0x94] sm:$0xf]
        %v861 = vld [vmem:[#allocation8 + $0x98] sm:$0xf]
        %v862 = vld [vmem:[#allocation8 + $0x9c] sm:$0xf]
        %v863 = vld [vmem:[#allocation8 + $0xa0] sm:$0xf]
        %v864 = vld [vmem:[#allocation8 + $0xa4] sm:$0xf]
        %v865 = vld [vmem:[#allocation8 + $0xa8] sm:$0xf]
        %v866 = vld [vmem:[#allocation8 + $0xac] sm:$0xf]
        %v867 = vld [vmem:[#allocation8 + $0xb0] sm:$0xf]
        %v868 = vld [vmem:[#allocation8 + $0xb4] sm:$0xf]
        %v869 = vld [vmem:[#allocation8 + $0xb8] sm:$0xf]
        %v870 = vld [vmem:[#allocation8 + $0xbc] sm:$0xf]
        %v871 = vld [vmem:[#allocation8 + $0xc0] sm:$0xf]
        %v872 = vld [vmem:[#allocation8 + $0xc4] sm:$0xf]
        %v873 = vld [vmem:[#allocation8 + $0xc8] sm:$0xf]
        %v874 = vld [vmem:[#allocation8 + $0xcc] sm:$0xf]
        %v875 = vld [vmem:[#allocation8 + $0xd0] sm:$0xf]
        %v876 = vld [vmem:[#allocation8 + $0xd4] sm:$0xf]
        %v877 = vld [vmem:[#allocation8 + $0xd8] sm:$0xf]
        %v878 = vld [vmem:[#allocation8 + $0xdc] sm:$0xf]
        %v879 = vld [vmem:[#allocation8 + $0xe0] sm:$0xf]
        %v880 = vld [vmem:[#allocation8 + $0xe4] sm:$0xf]
        %v881 = vld [vmem:[#allocation8 + $0xe8] sm:$0xf]
        %v882 = vld [vmem:[#allocation8 + $0xec] sm:$0xf]
        %v883 = vld [vmem:[#allocation8 + $0xf0] sm:$0xf]
        %v884 = vld [vmem:[#allocation8 + $0xf4] sm:$0xf]
        %v885 = vld [vmem:[#allocation8 + $0xf8] sm:$0xf]
        %v886 = vld [vmem:[#allocation8 + $0xfc] sm:$0xf]
        %v887 = vld [vmem:[#allocation8 + $0x100] sm:$0xf]
        %v888 = vld [vmem:[#allocation8 + $0x104] sm:$0xf]
        %v889 = vld [vmem:[#allocation8 + $0x108] sm:$0xf]
        %v890 = vld [vmem:[#allocation8 + $0x10c] sm:$0xf]
        %v891 = vld [vmem:[#allocation8 + $0x110] sm:$0xf]
        %v892 = vld [vmem:[#allocation8 + $0x114] sm:$0xf]
        %v893 = vld [vmem:[#allocation8 + $0x118] sm:$0xf]
        %v894 = vld [vmem:[#allocation8 + $0x11c] sm:$0xf]
        %v895 = vld [vmem:[#allocation8 + $0x120] sm:$0xf]
        %v896 = vld [vmem:[#allocation8 + $0x124] sm:$0xf]
        %v897 = vld [vmem:[#allocation8 + $0x128] sm:$0xf]
        %v898 = vld [vmem:[#allocation8 + $0x12c] sm:$0xf]
        %v899 = vld [vmem:[#allocation8 + $0x130] sm:$0xf]
        %v900 = vld [vmem:[#allocation8 + $0x134] sm:$0xf]
        %v901 = vld [vmem:[#allocation8 + $0x138] sm:$0xf]
        %v902 = vld [vmem:[#allocation8 + $0x13c] sm:$0xf]
        %v903 = vld [vmem:[#allocation8 + $0x140] sm:$0xf]
        %v904 = vld [vmem:[#allocation8 + $0x144] sm:$0xf]
        %v905 = vld [vmem:[#allocation8 + $0x148] sm:$0xf]
        %v906 = vld [vmem:[#allocation8 + $0x14c] sm:$0xf]
        %v907 = vld [vmem:[#allocation8 + $0x150] sm:$0xf]
        %v908 = vld [vmem:[#allocation8 + $0x154] sm:$0xf]
        %v909 = vld [vmem:[#allocation8 + $0x158] sm:$0xf]
        %v910 = vld [vmem:[#allocation8 + $0x15c] sm:$0xf]
        %v911 = vld [vmem:[#allocation8 + $0x160] sm:$0xf]
        %v912 = vld [vmem:[#allocation8 + $0x164] sm:$0xf]
        %v913 = vld [vmem:[#allocation8 + $0x168] sm:$0xf]
        %v914 = vld [vmem:[#allocation8 + $0x16c] sm:$0xf]
        %v915 = vld [vmem:[#allocation8 + $0x170] sm:$0xf]
        %v916 = vld [vmem:[#allocation8 + $0x174] sm:$0xf]
        %v917 = vld [vmem:[#allocation8 + $0x178] sm:$0xf]
        %v918 = vld [vmem:[#allocation8 + $0x17c] sm:$0xf]
        %v919 = vld [vmem:[#allocation8 + $0x180] sm:$0xf]
        %v920 = vld [vmem:[#allocation8 + $0x184] sm:$0xf]
        %v921 = vld [vmem:[#allocation8 + $0x188] sm:$0xf]
        %v922 = vld [vmem:[#allocation8 + $0x18c] sm:$0xf]
        %v923 = vld [vmem:[#allocation8 + $0x190] sm:$0xf]
        %v924 = vld [vmem:[#allocation8 + $0x194] sm:$0xf]
        %v925 = vld [vmem:[#allocation8 + $0x198] sm:$0xf]
        %v926 = vld [vmem:[#allocation8 + $0x19c] sm:$0xf]
        %v927 = vld [vmem:[#allocation8 + $0x1a0] sm:$0xf]
        %v928 = vld [vmem:[#allocation8 + $0x1a4] sm:$0xf]
        %v929 = vld [vmem:[#allocation8 + $0x1a8] sm:$0xf]
        %v930 = vld [vmem:[#allocation8 + $0x1ac] sm:$0xf]
        %v931 = vld [vmem:[#allocation8 + $0x1b0] sm:$0xf]
        %v932 = vld [vmem:[#allocation8 + $0x1b4] sm:$0xf]
        %v933 = vld [vmem:[#allocation8 + $0x1b8] sm:$0xf]
        %v934 = vld [vmem:[#allocation8 + $0x1bc] sm:$0xf]
        %v935 = vld [vmem:[#allocation8 + $0x1c0] sm:$0xf]
        %v936 = vld [vmem:[#allocation8 + $0x1c4] sm:$0xf]
        %v937 = vld [vmem:[#allocation8 + $0x1c8] sm:$0xf]
        %v938 = vld [vmem:[#allocation8 + $0x1cc] sm:$0xf]
        %v939 = vld [vmem:[#allocation8 + $0x1d0] sm:$0xf]
        %v940 = vld [vmem:[#allocation8 + $0x1d4] sm:$0xf]
        %v941 = vld [vmem:[#allocation8 + $0x1d8] sm:$0xf]
        %v942 = vld [vmem:[#allocation8 + $0x1dc] sm:$0xf]
        %v943 = vld [vmem:[#allocation8 + $0x1e0] sm:$0xf]
        %v944 = vld [vmem:[#allocation8 + $0x1e4] sm:$0xf]
        %v945 = vld [vmem:[#allocation8 + $0x1e8] sm:$0xf]
        %v946 = vld [vmem:[#allocation8 + $0x1ec] sm:$0xf]
        %v947 = vld [vmem:[#allocation8 + $0x1f0] sm:$0xf]
        %v948 = vld [vmem:[#allocation8 + $0x1f4] sm:$0xf]
        %v949 = vld [vmem:[#allocation8 + $0x1f8] sm:$0xf]
        %v950 = vld [vmem:[#allocation8 + $0x1fc] sm:$0xf]
        %v951 = vld [vmem:[#allocation8 + $0x200] sm:$0xf]
        %v952 = vld [vmem:[#allocation8 + $0x204] sm:$0xf]
        %v953 = vld [vmem:[#allocation8 + $0x208] sm:$0xf]
        %v954 = vld [vmem:[#allocation8 + $0x20c] sm:$0xf]
        %v955 = vld [vmem:[#allocation8 + $0x210] sm:$0xf]
        %v956 = vld [vmem:[#allocation8 + $0x214] sm:$0xf]
        %v957 = vld [vmem:[#allocation8 + $0x218] sm:$0xf]
        %v958 = vld [vmem:[#allocation8 + $0x21c] sm:$0xf]
        %v959 = vld [vmem:[#allocation8 + $0x220] sm:$0xf]
        %v960 = vld [vmem:[#allocation8 + $0x224] sm:$0xf]
        %v961 = vld [vmem:[#allocation8 + $0x228] sm:$0xf]
        %v962 = vld [vmem:[#allocation8 + $0x22c] sm:$0xf]
        %v963 = vld [vmem:[#allocation8 + $0x230] sm:$0xf]
        %v964 = vld [vmem:[#allocation8 + $0x234] sm:$0xf]
        %v965 = vld [vmem:[#allocation8 + $0x238] sm:$0xf]
        %v966 = vld [vmem:[#allocation8 + $0x23c] sm:$0xf]
        %v967 = vld [vmem:[%s4] sm:$0x1]
        %v969 = vlaneseq
        %v970 = vshrl.u32 %v969, 7
        %v971 = vsub.s32 0, %v970
        %v972 = vrot.slane %v967, %v971
        %v1118 = vunpack.c.l.b16 %v823
        %v1119 = vunpack.c.l.b16 %v824
        %v1120 = vunpack.c.l.b16 %v825
        %v1121 = vunpack.c.l.b16 %v826
        %v1122 = vunpack.c.l.b16 %v827
        %v1123 = vunpack.c.l.b16 %v828
        %v1124 = vunpack.c.l.b16 %v829
        %v1125 = vunpack.c.l.b16 %v830
        %v1126 = vunpack.c.l.b16 %v831
        %v1127 = vunpack.c.l.b16 %v832
        %v1128 = vunpack.c.l.b16 %v833
        %v1129 = vunpack.c.l.b16 %v834
        %v1130 = vunpack.c.l.b16 %v835
        %v1131 = vunpack.c.l.b16 %v836
        %v1132 = vunpack.c.l.b16 %v837
        %v1133 = vunpack.c.l.b16 %v838
        %v1134 = vunpack.c.l.b16 %v839
        %v1135 = vunpack.c.l.b16 %v840
        %v1136 = vunpack.c.l.b16 %v841
        %v1137 = vunpack.c.l.b16 %v842
        %v1138 = vunpack.c.l.b16 %v843
        %v1139 = vunpack.c.l.b16 %v844
        %v1140 = vunpack.c.l.b16 %v845
        %v1141 = vunpack.c.l.b16 %v846
        %v1142 = vunpack.c.l.b16 %v847
        %v1143 = vunpack.c.l.b16 %v848
        %v1144 = vunpack.c.l.b16 %v849
        %v1145 = vunpack.c.l.b16 %v850
        %v1146 = vunpack.c.l.b16 %v851
        %v1147 = vunpack.c.l.b16 %v852
        %v1148 = vunpack.c.l.b16 %v853
        %v1149 = vunpack.c.l.b16 %v854
        %v1150 = vunpack.c.l.b16 %v855
        %v1151 = vunpack.c.l.b16 %v856
        %v1152 = vunpack.c.l.b16 %v857
        %v1153 = vunpack.c.l.b16 %v858
        %v1154 = vunpack.c.l.b16 %v859
        %v1155 = vunpack.c.l.b16 %v860
        %v1156 = vunpack.c.l.b16 %v861
        %v1157 = vunpack.c.l.b16 %v862
        %v1158 = vunpack.c.l.b16 %v863
        %v1159 = vunpack.c.l.b16 %v864
        %v1160 = vunpack.c.l.b16 %v865
        %v1161 = vunpack.c.l.b16 %v866
        %v1162 = vunpack.c.l.b16 %v867
        %v1163 = vunpack.c.l.b16 %v868
        %v1164 = vunpack.c.l.b16 %v869
        %v1165 = vunpack.c.l.b16 %v870
        %v1166 = vunpack.c.l.b16 %v871
        %v1167 = vunpack.c.l.b16 %v872
        %v1168 = vunpack.c.l.b16 %v873
        %v1169 = vunpack.c.l.b16 %v874
        %v1170 = vunpack.c.l.b16 %v875
        %v1171 = vunpack.c.l.b16 %v876
        %v1172 = vunpack.c.l.b16 %v877
        %v1173 = vunpack.c.l.b16 %v878
        %v1174 = vunpack.c.l.b16 %v879
        %v1175 = vunpack.c.l.b16 %v880
        %v1176 = vunpack.c.l.b16 %v881
        %v1177 = vunpack.c.l.b16 %v882
        %v1178 = vunpack.c.l.b16 %v883
        %v1179 = vunpack.c.l.b16 %v884
        %v1180 = vunpack.c.l.b16 %v885
        %v1181 = vunpack.c.l.b16 %v886
        %v1182 = vunpack.c.l.b16 %v887
        %v1183 = vunpack.c.l.b16 %v888
        %v1184 = vunpack.c.l.b16 %v889
        %v1185 = vunpack.c.l.b16 %v890
        %v1186 = vunpack.c.l.b16 %v891
        %v1187 = vunpack.c.l.b16 %v892
        %v1188 = vunpack.c.l.b16 %v893
        %v1189 = vunpack.c.l.b16 %v894
        %v1190 = vunpack.c.l.b16 %v895
        %v1191 = vunpack.c.l.b16 %v896
        %v1192 = vunpack.c.l.b16 %v897
        %v1193 = vunpack.c.l.b16 %v898
        %v1194 = vunpack.c.l.b16 %v899
        %v1195 = vunpack.c.l.b16 %v900
        %v1196 = vunpack.c.l.b16 %v901
        %v1197 = vunpack.c.l.b16 %v902
        %v1198 = vunpack.c.l.b16 %v903
        %v1199 = vunpack.c.l.b16 %v904
        %v1200 = vunpack.c.l.b16 %v905
        %v1201 = vunpack.c.l.b16 %v906
        %v1202 = vunpack.c.l.b16 %v907
        %v1203 = vunpack.c.l.b16 %v908
        %v1204 = vunpack.c.l.b16 %v909
        %v1205 = vunpack.c.l.b16 %v910
        %v1206 = vunpack.c.l.b16 %v911
        %v1207 = vunpack.c.l.b16 %v912
        %v1208 = vunpack.c.l.b16 %v913
        %v1209 = vunpack.c.l.b16 %v914
        %v1210 = vunpack.c.l.b16 %v915
        %v1211 = vunpack.c.l.b16 %v916
        %v1212 = vunpack.c.l.b16 %v917
        %v1213 = vunpack.c.l.b16 %v918
        %v1214 = vunpack.c.l.b16 %v919
        %v1215 = vunpack.c.l.b16 %v920
        %v1216 = vunpack.c.l.b16 %v921
        %v1217 = vunpack.c.l.b16 %v922
        %v1218 = vunpack.c.l.b16 %v923
        %v1219 = vunpack.c.l.b16 %v924
        %v1220 = vunpack.c.l.b16 %v925
        %v1221 = vunpack.c.l.b16 %v926
        %v1222 = vunpack.c.l.b16 %v927
        %v1223 = vunpack.c.l.b16 %v928
        %v1224 = vunpack.c.l.b16 %v929
        %v1225 = vunpack.c.l.b16 %v930
        %v1226 = vunpack.c.l.b16 %v931
        %v1227 = vunpack.c.l.b16 %v932
        %v1228 = vunpack.c.l.b16 %v933
        %v1229 = vunpack.c.l.b16 %v934
        %v1230 = vunpack.c.l.b16 %v935
        %v1231 = vunpack.c.l.b16 %v936
        %v1232 = vunpack.c.l.b16 %v937
        %v1233 = vunpack.c.l.b16 %v938
        %v1234 = vunpack.c.l.b16 %v939
        %v1235 = vunpack.c.l.b16 %v940
        %v1236 = vunpack.c.l.b16 %v941
        %v1237 = vunpack.c.l.b16 %v942
        %v1238 = vunpack.c.l.b16 %v943
        %v1239 = vunpack.c.l.b16 %v944
        %v1240 = vunpack.c.l.b16 %v945
        %v1241 = vunpack.c.l.b16 %v946
        %v1242 = vunpack.c.l.b16 %v947
        %v1243 = vunpack.c.l.b16 %v948
        %v1244 = vunpack.c.l.b16 %v949
        %v1245 = vunpack.c.l.b16 %v950
        %v1246 = vunpack.c.l.b16 %v951
        %v1247 = vunpack.c.l.b16 %v952
        %v1248 = vunpack.c.l.b16 %v953
        %v1249 = vunpack.c.l.b16 %v954
        %v1250 = vunpack.c.l.b16 %v955
        %v1251 = vunpack.c.l.b16 %v956
        %v1252 = vunpack.c.l.b16 %v957
        %v1253 = vunpack.c.l.b16 %v958
        %v1254 = vunpack.c.l.b16 %v959
        %v1255 = vunpack.c.l.b16 %v960
        %v1256 = vunpack.c.l.b16 %v961
        %v1257 = vunpack.c.l.b16 %v962
        %v1258 = vunpack.c.l.b16 %v963
        %v1259 = vunpack.c.l.b16 %v964
        %v1260 = vunpack.c.l.b16 %v965
        %v1261 = vunpack.c.l.b16 %v966
        %v1262 = vpack.c.b16 %v1119, %v1118
        %v1263 = vpack.c.b16 %v1121, %v1120
        %v1264 = vpack.c.b16 %v1123, %v1122
        %v1265 = vpack.c.b16 %v1125, %v1124
        %v1266 = vpack.c.b16 %v1127, %v1126
        %v1267 = vpack.c.b16 %v1129, %v1128
        %v1268 = vpack.c.b16 %v1131, %v1130
        %v1269 = vpack.c.b16 %v1133, %v1132
        %v1270 = vpack.c.b16 %v1135, %v1134
        %v1271 = vpack.c.b16 %v1137, %v1136
        %v1272 = vpack.c.b16 %v1139, %v1138
        %v1273 = vpack.c.b16 %v1141, %v1140
        %v1274 = vpack.c.b16 %v1143, %v1142
        %v1275 = vpack.c.b16 %v1145, %v1144
        %v1276 = vpack.c.b16 %v1147, %v1146
        %v1277 = vpack.c.b16 %v1149, %v1148
        %v1278 = vpack.c.b16 %v1151, %v1150
        %v1279 = vpack.c.b16 %v1153, %v1152
        %v1280 = vpack.c.b16 %v1155, %v1154
        %v1281 = vpack.c.b16 %v1157, %v1156
        %v1282 = vpack.c.b16 %v1159, %v1158
        %v1283 = vpack.c.b16 %v1161, %v1160
        %v1284 = vpack.c.b16 %v1163, %v1162
        %v1285 = vpack.c.b16 %v1165, %v1164
        %v1286 = vpack.c.b16 %v1167, %v1166
        %v1287 = vpack.c.b16 %v1169, %v1168
        %v1288 = vpack.c.b16 %v1171, %v1170
        %v1289 = vpack.c.b16 %v1173, %v1172
        %v1290 = vpack.c.b16 %v1175, %v1174
        %v1291 = vpack.c.b16 %v1177, %v1176
        %v1292 = vpack.c.b16 %v1179, %v1178
        %v1293 = vpack.c.b16 %v1181, %v1180
        %v1294 = vpack.c.b16 %v1183, %v1182
        %v1295 = vpack.c.b16 %v1185, %v1184
        %v1296 = vpack.c.b16 %v1187, %v1186
        %v1297 = vpack.c.b16 %v1189, %v1188
        %v1298 = vpack.c.b16 %v1191, %v1190
        %v1299 = vpack.c.b16 %v1193, %v1192
        %v1300 = vpack.c.b16 %v1195, %v1194
        %v1301 = vpack.c.b16 %v1197, %v1196
        %v1302 = vpack.c.b16 %v1199, %v1198
        %v1303 = vpack.c.b16 %v1201, %v1200
        %v1304 = vpack.c.b16 %v1203, %v1202
        %v1305 = vpack.c.b16 %v1205, %v1204
        %v1306 = vpack.c.b16 %v1207, %v1206
        %v1307 = vpack.c.b16 %v1209, %v1208
        %v1308 = vpack.c.b16 %v1211, %v1210
        %v1309 = vpack.c.b16 %v1213, %v1212
        %v1310 = vpack.c.b16 %v1215, %v1214
        %v1311 = vpack.c.b16 %v1217, %v1216
        %v1312 = vpack.c.b16 %v1219, %v1218
        %v1313 = vpack.c.b16 %v1221, %v1220
        %v1314 = vpack.c.b16 %v1223, %v1222
        %v1315 = vpack.c.b16 %v1225, %v1224
        %v1316 = vpack.c.b16 %v1227, %v1226
        %v1317 = vpack.c.b16 %v1229, %v1228
        %v1318 = vpack.c.b16 %v1231, %v1230
        %v1319 = vpack.c.b16 %v1233, %v1232
        %v1320 = vpack.c.b16 %v1235, %v1234
        %v1321 = vpack.c.b16 %v1237, %v1236
        %v1322 = vpack.c.b16 %v1239, %v1238
        %v1323 = vpack.c.b16 %v1241, %v1240
        %v1324 = vpack.c.b16 %v1243, %v1242
        %v1325 = vpack.c.b16 %v1245, %v1244
        %v1326 = vpack.c.b16 %v1247, %v1246
        %v1327 = vpack.c.b16 %v1249, %v1248
        %v1328 = vpack.c.b16 %v1251, %v1250
        %v1329 = vpack.c.b16 %v1253, %v1252
        %v1330 = vpack.c.b16 %v1255, %v1254
        %v1331 = vpack.c.b16 %v1257, %v1256
        %v1332 = vpack.c.b16 %v1259, %v1258
        %v1333 = vpack.c.b16 %v1261, %v1260
        %1406 = vmatprep.subr.bf16.mxu0 0
        %1407 = vmatpush1.bf16.msra.mxu0 %v1262
        %1408 = vmatprep.subr.bf16.mxu0 0
        %1409 = vmatpush1.bf16.msra.mxu0 %v1263
        %1410 = vmatprep.subr.bf16.mxu0 0
        %1411 = vmatpush1.bf16.msra.mxu0 %v1264
        %1412 = vmatprep.subr.bf16.mxu0 0
        %1413 = vmatpush1.bf16.msra.mxu0 %v1265
        %1414 = vmatprep.subr.bf16.mxu0 0
        %1415 = vmatpush1.bf16.msra.mxu0 %v1266
        %1416 = vmatprep.subr.bf16.mxu0 0
        %1417 = vmatpush1.bf16.msra.mxu0 %v1267
        %1418 = vmatprep.subr.bf16.mxu0 0
        %1419 = vmatpush1.bf16.msra.mxu0 %v1268
        %1420 = vmatprep.subr.bf16.mxu0 0
        %1421 = vmatpush1.bf16.msra.mxu0 %v1269
        %1422 = vmatprep.subr.bf16.mxu0 0
        %1423 = vmatpush1.bf16.msra.mxu0 %v1270
        %1424 = vmatprep.subr.bf16.mxu0 0
        %1425 = vmatpush1.bf16.msra.mxu0 %v1271
        %1426 = vmatprep.subr.bf16.mxu0 0
        %1427 = vmatpush1.bf16.msra.mxu0 %v1272
        %1428 = vmatprep.subr.bf16.mxu0 0
        %1429 = vmatpush1.bf16.msra.mxu0 %v1273
        %1430 = vmatprep.subr.bf16.mxu0 0
        %1431 = vmatpush1.bf16.msra.mxu0 %v1274
        %1432 = vmatprep.subr.bf16.mxu0 0
        %1433 = vmatpush1.bf16.msra.mxu0 %v1275
        %1434 = vmatprep.subr.bf16.mxu0 0
        %1435 = vmatpush1.bf16.msra.mxu0 %v1276
        %1436 = vmatprep.subr.bf16.mxu0 0
        %1437 = vmatpush1.bf16.msra.mxu0 %v1277
        %1438 = vmatprep.mubr.bf16.mxu0 %v788
        %1439 = vmatmul.mubr.bf16.gmra.mrb[0].mxu0 %v787
        %v1440 = vpop.f32.mrb[0].mxu0
        %v1441 = vadd.f32 %v972, %v1440
        %v1442 = vpop.f32.mrb[0].mxu0
        %v1443 = vpop.f32.mrb[0].mxu0
        %v1444 = vadd.f32 %v972, %v1443
        %v1445 = vpop.f32.mrb[0].mxu0
        %1446 = vmatprep.mubr.bf16.mxu0 %v797
        %1447 = vmatmul.mubr.bf16.gmra.mrb[0].mxu0 %v796
        %v1448 = vpop.f32.mrb[0].mxu0
        %v1449 = vadd.f32 %v972, %v1448
        %v1450 = vpop.f32.mrb[0].mxu0
        %v1451 = vpop.f32.mrb[0].mxu0
        %v1452 = vadd.f32 %v972, %v1451
        %v1453 = vpop.f32.mrb[0].mxu0
        %1454 = vmatprep.mubr.bf16.mxu0 %v806
        %1455 = vmatmul.mubr.bf16.gmra.mrb[0].mxu0 %v805
        %v1456 = vpop.f32.mrb[0].mxu0
        %v1457 = vadd.f32 %v972, %v1456
        %v1458 = vpop.f32.mrb[0].mxu0
        %v1459 = vpop.f32.mrb[0].mxu0
        %v1460 = vadd.f32 %v972, %v1459
        %v1461 = vpop.f32.mrb[0].mxu0
        %1462 = vmatprep.mubr.bf16.mxu0 %v815
        %1463 = vmatmul.mubr.bf16.gmra.mrb[0].mxu0 %v814
        %v1464 = vpop.f32.mrb[0].mxu0
        %v1465 = vadd.f32 %v972, %v1464
        %v1466 = vpop.f32.mrb[0].mxu0
        %v1467 = vpop.f32.mrb[0].mxu0
        %v1468 = vadd.f32 %v972, %v1467
        %v1469 = vpop.f32.mrb[0].mxu0
        %1470 = vdwg.mxu0
        %1471 = vmatprep.subr.bf16.mxu0 0
        %1472 = vmatpush1.bf16.msra.mxu0 %v1278
        %1473 = vmatprep.subr.bf16.mxu0 0
        %1474 = vmatpush1.bf16.msra.mxu0 %v1279
        %1475 = vmatprep.subr.bf16.mxu0 0
        %1476 = vmatpush1.bf16.msra.mxu0 %v1280
        %1477 = vmatprep.subr.bf16.mxu0 0
        %1478 = vmatpush1.bf16.msra.mxu0 %v1281
        %1479 = vmatprep.subr.bf16.mxu0 0
        %1480 = vmatpush1.bf16.msra.mxu0 %v1282
        %1481 = vmatprep.subr.bf16.mxu0 0
        %1482 = vmatpush1.bf16.msra.mxu0 %v1283
        %1483 = vmatprep.subr.bf16.mxu0 0
        %1484 = vmatpush1.bf16.msra.mxu0 %v1284
        %1485 = vmatprep.subr.bf16.mxu0 0
        %1486 = vmatpush1.bf16.msra.mxu0 %v1285
        %1487 = vmatprep.subr.bf16.mxu0 0
        %1488 = vmatpush1.bf16.msra.mxu0 %v1286
        %1489 = vmatprep.subr.bf16.mxu0 0
        %1490 = vmatpush1.bf16.msra.mxu0 %v1287
        %1491 = vmatprep.subr.bf16.mxu0 0
        %1492 = vmatpush1.bf16.msra.mxu0 %v1288
        %1493 = vmatprep.subr.bf16.mxu0 0
        %1494 = vmatpush1.bf16.msra.mxu0 %v1289
        %1495 = vmatprep.subr.bf16.mxu0 0
        %1496 = vmatpush1.bf16.msra.mxu0 %v1290
        %1497 = vmatprep.subr.bf16.mxu0 0
        %1498 = vmatpush1.bf16.msra.mxu0 %v1291
        %1499 = vmatprep.subr.bf16.mxu0 0
        %1500 = vmatpush1.bf16.msra.mxu0 %v1292
        %1501 = vmatprep.subr.bf16.mxu0 0
        %1502 = vmatpush1.bf16.msra.mxu0 %v1293
        %1503 = vmatprep.mubr.bf16.mxu0 %v790
        %1504 = vmatmul.mubr.bf16.gmra.mrb[0].mxu0 %v789
        %v1505 = vpop.f32.mrb[0].mxu0
        %v1506 = vadd.f32 %v1441, %v1505
        %v1507 = vpop.f32.mrb[0].mxu0
        %v1508 = vpop.f32.mrb[0].mxu0
        %v1509 = vadd.f32 %v1444, %v1508
        %v1510 = vpop.f32.mrb[0].mxu0
        %1511 = vmatprep.mubr.bf16.mxu0 %v799
        %1512 = vmatmul.mubr.bf16.gmra.mrb[0].mxu0 %v798
        %v1513 = vpop.f32.mrb[0].mxu0
        %v1514 = vadd.f32 %v1449, %v1513
        %v1515 = vpop.f32.mrb[0].mxu0
        %v1516 = vpop.f32.mrb[0].mxu0
        %v1517 = vadd.f32 %v1452, %v1516
        %v1518 = vpop.f32.mrb[0].mxu0
        %1519 = vmatprep.mubr.bf16.mxu0 %v808
        %1520 = vmatmul.mubr.bf16.gmra.mrb[0].mxu0 %v807
        %v1521 = vpop.f32.mrb[0].mxu0
        %v1522 = vadd.f32 %v1457, %v1521
        %v1523 = vpop.f32.mrb[0].mxu0
        %v1524 = vpop.f32.mrb[0].mxu0
        %v1525 = vadd.f32 %v1460, %v1524
        %v1526 = vpop.f32.mrb[0].mxu0
        %1527 = vmatprep.mubr.bf16.mxu0 %v817
        %1528 = vmatmul.mubr.bf16.gmra.mrb[0].mxu0 %v816
        %v1529 = vpop.f32.mrb[0].mxu0
        %v1530 = vadd.f32 %v1465, %v1529
        %v1531 = vpop.f32.mrb[0].mxu0
        %v1532 = vpop.f32.mrb[0].mxu0
        %v1533 = vadd.f32 %v1468, %v1532
        %v1534 = vpop.f32.mrb[0].mxu0
        %1535 = vdwg.mxu0
        %1536 = vmatprep.subr.bf16.mxu0 0
        %1537 = vmatpush1.bf16.msra.mxu0 %v1294
        %1538 = vmatprep.subr.bf16.mxu0 0
        %1539 = vmatpush1.bf16.msra.mxu0 %v1295
        %1540 = vmatprep.subr.bf16.mxu0 0
        %1541 = vmatpush1.bf16.msra.mxu0 %v1296
        %1542 = vmatprep.subr.bf16.mxu0 0
        %1543 = vmatpush1.bf16.msra.mxu0 %v1297
        %1544 = vmatprep.subr.bf16.mxu0 0
        %1545 = vmatpush1.bf16.msra.mxu0 %v1298
        %1546 = vmatprep.subr.bf16.mxu0 0
        %1547 = vmatpush1.bf16.msra.mxu0 %v1299
        %1548 = vmatprep.subr.bf16.mxu0 0
        %1549 = vmatpush1.bf16.msra.mxu0 %v1300
        %1550 = vmatprep.subr.bf16.mxu0 0
        %1551 = vmatpush1.bf16.msra.mxu0 %v1301
        %1552 = vmatprep.subr.bf16.mxu0 0
        %1553 = vmatpush1.bf16.msra.mxu0 %v1302
        %1554 = vmatprep.subr.bf16.mxu0 0
        %1555 = vmatpush1.bf16.msra.mxu0 %v1303
        %1556 = vmatprep.subr.bf16.mxu0 0
        %1557 = vmatpush1.bf16.msra.mxu0 %v1304
        %1558 = vmatprep.subr.bf16.mxu0 0
        %1559 = vmatpush1.bf16.msra.mxu0 %v1305
        %1560 = vmatprep.subr.bf16.mxu0 0
        %1561 = vmatpush1.bf16.msra.mxu0 %v1306
        %1562 = vmatprep.subr.bf16.mxu0 0
        %1563 = vmatpush1.bf16.msra.mxu0 %v1307
        %1564 = vmatprep.subr.bf16.mxu0 0
        %1565 = vmatpush1.bf16.msra.mxu0 %v1308
        %1566 = vmatprep.subr.bf16.mxu0 0
        %1567 = vmatpush1.bf16.msra.mxu0 %v1309
        %1568 = vmatprep.mubr.bf16.mxu0 %v792
        %1569 = vmatmul.mubr.bf16.gmra.mrb[0].mxu0 %v791
        %v1570 = vpop.f32.mrb[0].mxu0
        %v1571 = vadd.f32 %v1506, %v1570
        %v1572 = vpop.f32.mrb[0].mxu0
        %v1573 = vpop.f32.mrb[0].mxu0
        %v1574 = vadd.f32 %v1509, %v1573
        %v1575 = vpop.f32.mrb[0].mxu0
        %1576 = vmatprep.mubr.bf16.mxu0 %v801
        %1577 = vmatmul.mubr.bf16.gmra.mrb[0].mxu0 %v800
        %v1578 = vpop.f32.mrb[0].mxu0
        %v1579 = vadd.f32 %v1514, %v1578
        %v1580 = vpop.f32.mrb[0].mxu0
        %v1581 = vpop.f32.mrb[0].mxu0
        %v1582 = vadd.f32 %v1517, %v1581
        %v1583 = vpop.f32.mrb[0].mxu0
        %1584 = vmatprep.mubr.bf16.mxu0 %v810
        %1585 = vmatmul.mubr.bf16.gmra.mrb[0].mxu0 %v809
        %v1586 = vpop.f32.mrb[0].mxu0
        %v1587 = vadd.f32 %v1522, %v1586
        %v1588 = vpop.f32.mrb[0].mxu0
        %v1589 = vpop.f32.mrb[0].mxu0
        %v1590 = vadd.f32 %v1525, %v1589
        %v1591 = vpop.f32.mrb[0].mxu0
        %1592 = vmatprep.mubr.bf16.mxu0 %v819
        %1593 = vmatmul.mubr.bf16.gmra.mrb[0].mxu0 %v818
        %v1594 = vpop.f32.mrb[0].mxu0
        %v1595 = vadd.f32 %v1530, %v1594
        %v1596 = vpop.f32.mrb[0].mxu0
        %v1597 = vpop.f32.mrb[0].mxu0
        %v1598 = vadd.f32 %v1533, %v1597
        %v1599 = vpop.f32.mrb[0].mxu0
        %1600 = vdwg.mxu0
        %1601 = vmatprep.subr.bf16.mxu0 0
        %1602 = vmatpush1.bf16.msra.mxu0 %v1310
        %1603 = vmatprep.subr.bf16.mxu0 0
        %1604 = vmatpush1.bf16.msra.mxu0 %v1311
        %1605 = vmatprep.subr.bf16.mxu0 0
        %1606 = vmatpush1.bf16.msra.mxu0 %v1312
        %1607 = vmatprep.subr.bf16.mxu0 0
        %1608 = vmatpush1.bf16.msra.mxu0 %v1313
        %1609 = vmatprep.subr.bf16.mxu0 0
        %1610 = vmatpush1.bf16.msra.mxu0 %v1314
        %1611 = vmatprep.subr.bf16.mxu0 0
        %1612 = vmatpush1.bf16.msra.mxu0 %v1315
        %1613 = vmatprep.subr.bf16.mxu0 0
        %1614 = vmatpush1.bf16.msra.mxu0 %v1316
        %1615 = vmatprep.subr.bf16.mxu0 0
        %1616 = vmatpush1.bf16.msra.mxu0 %v1317
        %1617 = vmatprep.subr.bf16.mxu0 0
        %1618 = vmatpush1.bf16.msra.mxu0 %v1318
        %1619 = vmatprep.subr.bf16.mxu0 0
        %1620 = vmatpush1.bf16.msra.mxu0 %v1319
        %1621 = vmatprep.subr.bf16.mxu0 0
        %1622 = vmatpush1.bf16.msra.mxu0 %v1320
        %1623 = vmatprep.subr.bf16.mxu0 0
        %1624 = vmatpush1.bf16.msra.mxu0 %v1321
        %1625 = vmatprep.subr.bf16.mxu0 0
        %1626 = vmatpush1.bf16.msra.mxu0 %v1322
        %1627 = vmatprep.subr.bf16.mxu0 0
        %1628 = vmatpush1.bf16.msra.mxu0 %v1323
        %1629 = vmatprep.subr.bf16.mxu0 0
        %1630 = vmatpush1.bf16.msra.mxu0 %v1324
        %1631 = vmatprep.subr.bf16.mxu0 0
        %1632 = vmatpush1.bf16.msra.mxu0 %v1325
        %1633 = vmatprep.mubr.bf16.mxu0 %v794
        %1634 = vmatmul.mubr.bf16.gmra.mrb[0].mxu0 %v793
        %v1635 = vpop.f32.mrb[0].mxu0
        %v1636 = vadd.f32 %v1571, %v1635
        %v1637 = vpop.f32.mrb[0].mxu0
        %v1638 = vpop.f32.mrb[0].mxu0
        %v1639 = vadd.f32 %v1574, %v1638
        %v1640 = vpop.f32.mrb[0].mxu0
        %1641 = vmatprep.mubr.bf16.mxu0 %v803
        %1642 = vmatmul.mubr.bf16.gmra.mrb[0].mxu0 %v802
        %v1643 = vpop.f32.mrb[0].mxu0
        %v1644 = vadd.f32 %v1579, %v1643
        %v1645 = vpop.f32.mrb[0].mxu0
        %v1646 = vpop.f32.mrb[0].mxu0
        %v1647 = vadd.f32 %v1582, %v1646
        %v1648 = vpop.f32.mrb[0].mxu0
        %1649 = vmatprep.mubr.bf16.mxu0 %v812
        %1650 = vmatmul.mubr.bf16.gmra.mrb[0].mxu0 %v811
        %v1651 = vpop.f32.mrb[0].mxu0
        %v1652 = vadd.f32 %v1587, %v1651
        %v1653 = vpop.f32.mrb[0].mxu0
        %v1654 = vpop.f32.mrb[0].mxu0
        %v1655 = vadd.f32 %v1590, %v1654
        %v1656 = vpop.f32.mrb[0].mxu0
        %1657 = vmatprep.mubr.bf16.mxu0 %v821
        %1658 = vmatmul.mubr.bf16.gmra.mrb[0].mxu0 %v820
        %v1659 = vpop.f32.mrb[0].mxu0
        %v1660 = vadd.f32 %v1595, %v1659
        %v1661 = vpop.f32.mrb[0].mxu0
        %v1662 = vpop.f32.mrb[0].mxu0
        %v1663 = vadd.f32 %v1598, %v1662
        %v1664 = vpop.f32.mrb[0].mxu0
        %1665 = vdwg.mxu0
        %1666 = vmatprep.subr.bf16.mxu0 0
        %1667 = vmatpush1.bf16.msra.mxu0 %v1326
        %1668 = vmatprep.subr.bf16.mxu0 0
        %1669 = vmatpush1.bf16.msra.mxu0 %v1327
        %1670 = vmatprep.subr.bf16.mxu0 0
        %1671 = vmatpush1.bf16.msra.mxu0 %v1328
        %1672 = vmatprep.subr.bf16.mxu0 0
        %1673 = vmatpush1.bf16.msra.mxu0 %v1329
        %1674 = vmatprep.subr.bf16.mxu0 0
        %1675 = vmatpush1.bf16.msra.mxu0 %v1330
        %1676 = vmatprep.subr.bf16.mxu0 0
        %1677 = vmatpush1.bf16.msra.mxu0 %v1331
        %1678 = vmatprep.subr.bf16.mxu0 0
        %1679 = vmatpush1.bf16.msra.mxu0 %v1332
        %1680 = vmatprep.subr.bf16.mxu0 0
        %1681 = vmatpush1.bf16.msra.mxu0 %v1333
        %1682 = vmatprep.subr.bf16.mxu0 0
        %1683 = vmatpush1.bf16.msra.mxu0 0
        %1684 = vmatprep.subr.bf16.mxu0 0
        %1685 = vmatpush1.bf16.msra.mxu0 0
        %1686 = vmatprep.subr.bf16.mxu0 0
        %1687 = vmatpush1.bf16.msra.mxu0 0
        %1688 = vmatprep.subr.bf16.mxu0 0
        %1689 = vmatpush1.bf16.msra.mxu0 0
        %1690 = vmatprep.subr.bf16.mxu0 0
        %1691 = vmatpush1.bf16.msra.mxu0 0
        %1692 = vmatprep.subr.bf16.mxu0 0
        %1693 = vmatpush1.bf16.msra.mxu0 0
        %1694 = vmatprep.subr.bf16.mxu0 0
        %1695 = vmatpush1.bf16.msra.mxu0 0
        %1696 = vmatprep.subr.bf16.mxu0 0
        %1697 = vmatpush1.bf16.msra.mxu0 0
        %1698 = vmatprep.mubr.bf16.mxu0 0
        %1699 = vmatmul.mubr.bf16.gmra.mrb[0].mxu0 %v795
        %v1700 = vpop.f32.mrb[0].mxu0
        %v1701 = vadd.f32 %v1636, %v1700
        %v1702 = vpop.f32.mrb[0].mxu0
        %v1703 = vpop.f32.mrb[0].mxu0
        %v1704 = vadd.f32 %v1639, %v1703
        %v1705 = vpop.f32.mrb[0].mxu0
        %1706 = vmatprep.mubr.bf16.mxu0 0
        %1707 = vmatmul.mubr.bf16.gmra.mrb[0].mxu0 %v804
        %v1708 = vpop.f32.mrb[0].mxu0
        %v1709 = vadd.f32 %v1644, %v1708
        %v1710 = vpop.f32.mrb[0].mxu0
        %v1711 = vpop.f32.mrb[0].mxu0
        %v1712 = vadd.f32 %v1647, %v1711
        %v1713 = vpop.f32.mrb[0].mxu0
        %1714 = vmatprep.mubr.bf16.mxu0 0
        %1715 = vmatmul.mubr.bf16.gmra.mrb[0].mxu0 %v813
        %v1716 = vpop.f32.mrb[0].mxu0
        %v1717 = vadd.f32 %v1652, %v1716
        %v1718 = vpop.f32.mrb[0].mxu0
        %v1719 = vpop.f32.mrb[0].mxu0
        %v1720 = vadd.f32 %v1655, %v1719
        %v1721 = vpop.f32.mrb[0].mxu0
        %1722 = vmatprep.mubr.bf16.mxu0 0
        %1723 = vmatmul.mubr.bf16.gmra.mrb[0].mxu0 %v822
        %v1724 = vpop.f32.mrb[0].mxu0
        %v1725 = vadd.f32 %v1660, %v1724
        %v1726 = vpop.f32.mrb[0].mxu0
        %v1727 = vpop.f32.mrb[0].mxu0
        %v1728 = vadd.f32 %v1663, %v1727
        %v1729 = vpop.f32.mrb[0].mxu0
        %1730 = vdwg.mxu0
        %v1731 = vmax.f32 %v1701, 0.0
        %v1732 = vmax.f32 %v1704, 0.0
        %v1733 = vmax.f32 %v1709, 0.0
        %v1734 = vmax.f32 %v1712, 0.0
        %v1735 = vmax.f32 %v1717, 0.0
        %v1736 = vmax.f32 %v1720, 0.0
        %v1737 = vmax.f32 %v1725, 0.0
        %v1738 = vmax.f32 %v1728, 0.0
        %v1739 = vpack.c.bf16 %v1732, %v1731
        %v1740 = vpack.c.bf16 %v1734, %v1733
        %v1741 = vpack.c.bf16 %v1736, %v1735
        %v1742 = vpack.c.bf16 %v1738, %v1737
        %v1743 = vld [vmem:[#allocation9] sm:$0xf]
        %v1744 = vld [vmem:[#allocation9 + $0x4] sm:$0xf]
        %v1745 = vld [vmem:[#allocation9 + $0x8] sm:$0xf]
        %v1746 = vld [vmem:[#allocation9 + $0xc] sm:$0xf]
        %v1747 = vld [vmem:[#allocation9 + $0x10] sm:$0xf]
        %v1748 = vld [vmem:[#allocation9 + $0x14] sm:$0xf]
        %v1749 = vld [vmem:[#allocation9 + $0x18] sm:$0xf]
        %v1750 = vld [vmem:[#allocation9 + $0x1c] sm:$0xf]
        %v1751 = vld [vmem:[#allocation9 + $0x20] sm:$0xf]
        %v1752 = vld [vmem:[#allocation9 + $0x24] sm:$0xf]
        %v1753 = vld [vmem:[#allocation9 + $0x28] sm:$0xf]
        %v1754 = vld [vmem:[#allocation9 + $0x2c] sm:$0xf]
        %v1755 = vld [vmem:[#allocation9 + $0x30] sm:$0xf]
        %v1756 = vld [vmem:[#allocation9 + $0x34] sm:$0xf]
        %v1757 = vld [vmem:[#allocation9 + $0x38] sm:$0xf]
        %v1758 = vld [vmem:[#allocation9 + $0x3c] sm:$0xf]
        %v1759 = vld [vmem:[%s6] sm:$0x1]
        %v1761 = vlaneseq
        %v1762 = vshrl.u32 %v1761, 7
        %v1763 = vsub.s32 0, %v1762
        %v1764 = vrot.slane %v1759, %v1763
        %v1782 = vunpack.c.l.b16 %v1743
        %v1783 = vunpack.c.l.b16 %v1744
        %v1784 = vunpack.c.l.b16 %v1745
        %v1785 = vunpack.c.l.b16 %v1746
        %v1786 = vunpack.c.l.b16 %v1747
        %v1787 = vunpack.c.l.b16 %v1748
        %v1788 = vunpack.c.l.b16 %v1749
        %v1789 = vunpack.c.l.b16 %v1750
        %v1790 = vunpack.c.l.b16 %v1751
        %v1791 = vunpack.c.l.b16 %v1752
        %v1792 = vunpack.c.l.b16 %v1753
        %v1793 = vunpack.c.l.b16 %v1754
        %v1794 = vunpack.c.l.b16 %v1755
        %v1795 = vunpack.c.l.b16 %v1756
        %v1796 = vunpack.c.l.b16 %v1757
        %v1797 = vunpack.c.l.b16 %v1758
        %v1798 = vpack.c.b16 %v1783, %v1782
        %v1799 = vpack.c.b16 %v1785, %v1784
        %v1800 = vpack.c.b16 %v1787, %v1786
        %v1801 = vpack.c.b16 %v1789, %v1788
        %v1802 = vpack.c.b16 %v1791, %v1790
        %v1803 = vpack.c.b16 %v1793, %v1792
        %v1804 = vpack.c.b16 %v1795, %v1794
        %v1805 = vpack.c.b16 %v1797, %v1796
        %1814 = vmatprep.subr.bf16.mxu0 0
        %1815 = vmatpush1.bf16.msra.mxu0 %v1798
        %1816 = vmatprep.subr.bf16.mxu0 0
        %1817 = vmatpush1.bf16.msra.mxu0 %v1799
        %1818 = vmatprep.subr.bf16.mxu0 0
        %1819 = vmatpush1.bf16.msra.mxu0 %v1800
        %1820 = vmatprep.subr.bf16.mxu0 0
        %1821 = vmatpush1.bf16.msra.mxu0 %v1801
        %1822 = vmatprep.subr.bf16.mxu0 0
        %1823 = vmatpush1.bf16.msra.mxu0 %v1802
        %1824 = vmatprep.subr.bf16.mxu0 0
        %1825 = vmatpush1.bf16.msra.mxu0 %v1803
        %1826 = vmatprep.subr.bf16.mxu0 0
        %1827 = vmatpush1.bf16.msra.mxu0 %v1804
        %1828 = vmatprep.subr.bf16.mxu0 0
        %1829 = vmatpush1.bf16.msra.mxu0 %v1805
        %1830 = vmatprep.subr.bf16.mxu0 0
        %1831 = vmatpush1.bf16.msra.mxu0 0
        %1832 = vmatprep.subr.bf16.mxu0 0
        %1833 = vmatpush1.bf16.msra.mxu0 0
        %1834 = vmatprep.subr.bf16.mxu0 0
        %1835 = vmatpush1.bf16.msra.mxu0 0
        %1836 = vmatprep.subr.bf16.mxu0 0
        %1837 = vmatpush1.bf16.msra.mxu0 0
        %1838 = vmatprep.subr.bf16.mxu0 0
        %1839 = vmatpush1.bf16.msra.mxu0 0
        %1840 = vmatprep.subr.bf16.mxu0 0
        %1841 = vmatpush1.bf16.msra.mxu0 0
        %1842 = vmatprep.subr.bf16.mxu0 0
        %1843 = vmatpush1.bf16.msra.mxu0 0
        %1844 = vmatprep.subr.bf16.mxu0 0
        %1845 = vmatpush1.bf16.msra.mxu0 0
        %1846 = vmatprep.mubr.bf16.mxu0 0
        %1847 = vmatmul.mubr.bf16.gmra.mrb[0].mxu0 %v1739
        %v1848 = vpop.f32.mrb[0].mxu0
        %v1849 = vadd.f32 %v1764, %v1848
        %v1850 = vpop.f32.mrb[0].mxu0
        %v1851 = vpop.f32.mrb[0].mxu0
        %v1852 = vadd.f32 %v1764, %v1851
        %v1853 = vpop.f32.mrb[0].mxu0
        %1854 = vmatprep.mubr.bf16.mxu0 0
        %1855 = vmatmul.mubr.bf16.gmra.mrb[0].mxu0 %v1740
        %v1856 = vpop.f32.mrb[0].mxu0
        %v1857 = vadd.f32 %v1764, %v1856
        %v1858 = vpop.f32.mrb[0].mxu0
        %v1859 = vpop.f32.mrb[0].mxu0
        %v1860 = vadd.f32 %v1764, %v1859
        %v1861 = vpop.f32.mrb[0].mxu0
        %1862 = vmatprep.mubr.bf16.mxu0 0
        %1863 = vmatmul.mubr.bf16.gmra.mrb[0].mxu0 %v1741
        %v1864 = vpop.f32.mrb[0].mxu0
        %v1865 = vadd.f32 %v1764, %v1864
        %v1866 = vpop.f32.mrb[0].mxu0
        %v1867 = vpop.f32.mrb[0].mxu0
        %v1868 = vadd.f32 %v1764, %v1867
        %v1869 = vpop.f32.mrb[0].mxu0
        %1870 = vmatprep.mubr.bf16.mxu0 0
        %1871 = vmatmul.mubr.bf16.gmra.mrb[0].mxu0 %v1742
        %v1872 = vpop.f32.mrb[0].mxu0
        %v1873 = vadd.f32 %v1764, %v1872
        %v1874 = vpop.f32.mrb[0].mxu0
        %v1875 = vpop.f32.mrb[0].mxu0
        %v1876 = vadd.f32 %v1764, %v1875
        %v1877 = vpop.f32.mrb[0].mxu0
        %1878 = vdwg.mxu0
        %v1879 = vadd.f32 %v1849, %v342
        %v1880 = vadd.f32 %v1852, %v343
        %v1881 = vadd.f32 %v1857, %v344
        %v1882 = vadd.f32 %v1860, %v345
        %v1883 = vadd.f32 %v1865, %v346
        %v1884 = vadd.f32 %v1868, %v347
        %v1885 = vadd.f32 %v1873, %v348
        %v1886 = vadd.f32 %v1876, %v349
        %v1887 = vmax.f32 %v1879, 0.0
        %v1888 = vmax.f32 %v1880, 0.0
        %v1889 = vmax.f32 %v1881, 0.0
        %v1890 = vmax.f32 %v1882, 0.0
        %v1891 = vmax.f32 %v1883, 0.0
        %v1892 = vmax.f32 %v1884, 0.0
        %v1893 = vmax.f32 %v1885, 0.0
        %v1894 = vmax.f32 %v1886, 0.0
        %1895 = vst [vmem:[%s340] sm:$0xff] %v1887
        %1896 = vst [vmem:[%s340 + $0x8] sm:$0xff] %v1888
        %1897 = vst [vmem:[%s340 + $0x10] sm:$0xff] %v1889
        %1898 = vst [vmem:[%s340 + $0x18] sm:$0xff] %v1890
        %1899 = vst [vmem:[%s340 + $0x20] sm:$0xff] %v1891
        %1900 = vst [vmem:[%s340 + $0x28] sm:$0xff] %v1892
        %1901 = vst [vmem:[%s340 + $0x30] sm:$0xff] %v1893
        %1902 = vst [vmem:[%s340 + $0x38] sm:$0xff] %v1894
        %s1903 = sand.u32 %s186, 1
        %s1904 = scalar_lea.sflag [#allocation5], %s1903
        %s1905 = sand.u32 %s186, 1
        %s1906 = smul.addr %s1905, 64
        %s1907 = scalar_lea.vmem [#allocation11], %s1906
        // Predicated region
        $region65: #{tpu_custom_call.1} parent=47 // pred_check
          %p1908 = pneg %p196
        $region66: #{tpu_custom_call.1} parent=47 // pred_check_branch
          %1910 = sbr.rel (%p1908) target = $region68
        $region67: #{tpu_custom_call.1} parent=47 // pred_region
          %s1912 = ssub.s32 1024, 1024
          %1913 = vsyncadd %s1904, %s1912
          %s1914 = smul.addr %s26, 8
          %s1915 = smul.addr %s1914, 128
          %s1916 = scalar_lea.hbm %s7, %s1915
          %s1917 = sshll.u32 %s1907, 4
          %s1918 = int_to_ptr.vmem [resolvable:$true] %s1917
          %1923 = dma.vmem_to_hbm [thread:$0]  %s1918, 1024, %s1916, %s1904, 128, 128, 8
        $region68: #{tpu_custom_call.1} parent=47 // pred_fallthru
          _
      $region48: #{tpu_custom_call.1} parent=5 // pred_fallthru
        _
      %p1924 = scmp.le.s32.totalorder 2, %s21
      // Predicated region
      $region69: #{tpu_custom_call.1} parent=5 // pred_check
        %p1925 = pneg %p1924
      $region70: #{tpu_custom_call.1} parent=5 // pred_check_branch
        %1927 = sbr.rel (%p1925) target = $region72
      $region71: #{tpu_custom_call.1} parent=5 // pred_region
        %s1928 = ssub.s32 %s21, 2
        // Predicated region
        $region73: #{tpu_custom_call.1} parent=71 // pred_check
          %p1929 = pneg %p202
        $region74: #{tpu_custom_call.1} parent=71 // pred_check_branch
          %1931 = sbr.rel (%p1929) target = $region76
        $region75: #{tpu_custom_call.1} parent=71 // pred_region
          %s1932 = sand.u32 %s187, 1
          %s1933 = scalar_lea.sflag [#allocation5], %s1932
          %s1934 = sand.u32 %s187, 1
          %s1935 = smul.addr %s1934, 64
          %s1936 = scalar_lea.vmem [#allocation11], %s1935
          %1937 = dma.done %s1933, 1024
        $region76: #{tpu_custom_call.1} parent=71 // pred_fallthru
          _
      $region72: #{tpu_custom_call.1} parent=5 // pred_fallthru
        _
    $region6: #{tpu_custom_call.1} parent=1 // loop_footer
      %s25 = sadd.s32 1, %s21
    $region7: #{tpu_custom_call.1} parent=1 // loop_footer_branch
      %20 = sbr.rel target = $region3
    $region8: #{tpu_custom_call.1} parent=1 // loop_exit
      _
    %1938 = vsyncpa [#allocation4], 1
    %s1939 = scalar_lea.sflag [#allocation4], 1
    %1940 = vsyncpa %s1939, 1
    %1941 = vsyncpa [#allocation7], 1
    %1942 = vsyncpa [#allocation10], 1
    %1943 = vsyncpa [#allocation5], 1
    %s1944 = scalar_lea.sflag [#allocation5], 1
    %1945 = vsyncpa %s1944, 1

</llo_original>
